<compile_context>
chip_gen: v6e
topology: v6e:2x2x1
jax: 0.10.0
libtpu: 0.0.40
codegen_flags: <defaults>
</compile_context>

<pallas_src>
import jax
import jax.numpy as jnp
from jax.experimental import pallas as pl
from jax.experimental.pallas import tpu as pltpu


def _pointnet_max_kernel(x_ref, w_ref, o_ref, *, precision):
    # x_ref: (TR, G*P*Cin)  packed rows of G voxels (lane-dense, 128 lanes)
    # w_ref: (G*P*Cin, P*G*Cout)  block-diagonal weight, point-major columns
    # o_ref: (TR, G*Cout)  lane-dense output (multiple of 128 lanes)
    x = x_ref[...]
    gc = o_ref.shape[-1]             # G * Cout  (512 for G=8, Cout=64)
    n_pts = w_ref.shape[-1] // gc    # P
    # Incremental max over point chunks: one MXU push per point, acc stays
    # a single (TR, G*Cout) slab instead of a (TR, P*G*Cout) monster.
    acc = jnp.dot(x, w_ref[:, 0:gc],
                  preferred_element_type=jnp.float32, precision=precision)
    for p in range(1, n_pts):
        y_p = jnp.dot(x, w_ref[:, p * gc:(p + 1) * gc],
                      preferred_element_type=jnp.float32, precision=precision)
        acc = jnp.maximum(acc, y_p)
    o_ref[...] = acc.astype(o_ref.dtype)


def radar_sparse_processor_forward(voxel_features, voxel_num_points,
                                   voxel_coords, weight_t, *,
                                   vox_per_row=8, tile_rows=256,
                                   precision=jax.lax.Precision.DEFAULT):
    """voxel_features: (N, P, Cin) f32; weight_t: (Cin, Cout) f32 (= torch W.T)."""
    n_vox, n_pts, c_in = voxel_features.shape
    c_out = weight_t.shape[1]
    g = vox_per_row

    # Glue outputs (match the PyTorch module's non-hot-path results).
    spatial_indices = voxel_coords.astype(jnp.int32)
    if n_vox > 0:
        batch_size = jnp.max(voxel_coords[:, 0]).astype(jnp.int32) + 1
    else:
        batch_size = jnp.int32(0)   # guard: max over empty set is undefined

    if n_vox == 0:
        return {
            "spatial_features": jnp.zeros((0, c_out), jnp.float32),
            "spatial_indices": spatial_indices,
            "batch_size": batch_size,
            "voxel_num_points": voxel_num_points,
        }

    # ---- pack G voxels per row (free, contiguous row-major reshapes) --------
    x2 = voxel_features.reshape(n_vox, n_pts * c_in)
    if n_vox % g:
        # TODO(synk): this pad copies x once in HBM; only taken when N % 8 != 0
        # (production pipelines pad the voxel buffer to a fixed multiple).
        x2 = jnp.pad(x2, ((0, g - n_vox % g), (0, 0)))
    n_pad = x2.shape[0]
    n_rows = n_pad // g
    x_packed = x2.reshape(n_rows, g * n_pts * c_in)       # (N/8, 128)

    # ---- block-diagonal weight, point-major columns --------------------------
    # w_bd[gg*P*Cin + p*Cin + c,  p*G*Cout + hh*Cout + o] = W[c, o]  iff hh == gg
    # Built with pure broadcast-multiplies (exact in f32, no matmul rounding).
    eye_p = jnp.eye(n_pts, dtype=weight_t.dtype)
    eye_g = jnp.eye(g, dtype=weight_t.dtype)
    w_bd = (eye_g[:, None, None, None, :, None]           # (G,1,1,1,G,1)
            * eye_p[None, :, None, :, None, None]         # (1,P,1,P,1,1)
            * weight_t[None, None, :, None, None, :])     # (1,1,Cin,1,1,Cout)
    w_bd = w_bd.reshape(g * n_pts * c_in, n_pts * g * c_out)   # (128, 2048)

    # ---- tiling: big tiles, but keep >= 2 grid steps for v7x megacore --------
    tile_rows = max(8, (tile_rows // 8) * 8)
    if n_rows >= 16:
        half_aligned = (((n_rows + 1) // 2 + 7) // 8) * 8
        tile_rows = min(tile_rows, half_aligned)
    else:
        tile_rows = n_rows            # full-extent block (no /8 requirement)
    n_tiles = pl.cdiv(n_rows, tile_rows)   # ragged last tile handled by Pallas

    kernel = lambda x_ref, w_ref, o_ref: _pointnet_max_kernel(
        x_ref, w_ref, o_ref, precision=precision)

    out_packed = pl.pallas_call(
        kernel,
        out_shape=jax.ShapeDtypeStruct((n_rows, g * c_out), jnp.float32),
        grid_spec=pltpu.PrefetchScalarGridSpec(
            num_scalar_prefetch=0,
            grid=(n_tiles,),
            in_specs=[
                pl.BlockSpec((tile_rows, g * n_pts * c_in), lambda i: (i, 0)),
                # Tiny weight (1 MiB), constant index_map -> resident across grid.
                pl.BlockSpec((g * n_pts * c_in, n_pts * g * c_out),
                             lambda i: (0, 0)),
            ],
            out_specs=pl.BlockSpec((tile_rows, g * c_out), lambda i: (i, 0)),
        ),
        compiler_params=pltpu.CompilerParams(
            dimension_semantics=("parallel",)),
    )(x_packed, w_bd)

    # (N/8, G*Cout) -> (N_pad, Cout) is a free row-major reshape; slice off pad.
    spatial_features = out_packed.reshape(n_pad, c_out)[:n_vox]

    return {
        "spatial_features": spatial_features,
        "spatial_indices": spatial_indices,
        "batch_size": batch_size,
        "voxel_num_points": voxel_num_points,
    }


if __name__ == "__main__":
    key = jax.random.PRNGKey(0)
    k_feat, k_w, k_coord_b, k_coord_xyz, k_np = jax.random.split(key, 5)

    # Shapes consistent with the module: Cin=4, P=4 (max pts/voxel), Cout=64.
    # N_VOX is a multiple of 8 (hot path: no pad copy) but NOT a multiple of
    # the tile size, exercising Pallas' native ragged-last-tile handling.
    N_VOX, N_PTS, C_IN, C_OUT = 1000, 4, 4, 64

    # Inputs rounded to bf16-exact f32 values so the correctness check is
    # independent of the MXU's f32 precision mode (default bf16 passes vs f32).
    voxel_features = jax.random.normal(
        k_feat, (N_VOX, N_PTS, C_IN), dtype=jnp.float32
    ).astype(jnp.bfloat16).astype(jnp.float32)
    voxel_num_points = jax.random.randint(k_np, (N_VOX,), 1, N_PTS + 1,
                                          dtype=jnp.int32)
    # coords: (batch_idx, z, y, x)
    voxel_coords = jnp.concatenate(
        [jax.random.randint(k_coord_b, (N_VOX, 1), 0, 2, dtype=jnp.int32),
         jax.random.randint(k_coord_xyz, (N_VOX, 3), 0, 16, dtype=jnp.int32)],
        axis=1)

    # "nn.Linear(4, 64, bias=False)" weight; torch stores (out, in), we keep
    # the transpose (in, out) for the kernel matmul.
    bound = 1.0 / jnp.sqrt(jnp.float32(C_IN))
    weight = jax.random.uniform(k_w, (C_OUT, C_IN), dtype=jnp.float32,
                                minval=-bound, maxval=bound)
    weight_t = weight.T.astype(jnp.bfloat16).astype(jnp.float32)

    out = radar_sparse_processor_forward(voxel_features, voxel_num_points,
                                         voxel_coords, weight_t)
    jax.block_until_ready(out["spatial_features"])

    # Reference check in plain JAX (same semantics as the torch forward).
    ref = jnp.max(jnp.einsum("npc,co->npo", voxel_features, weight_t), axis=1)
    assert out["spatial_features"].shape == (N_VOX, C_OUT)
    assert jnp.allclose(out["spatial_features"], ref, atol=1e-5, rtol=1e-5)
    assert out["spatial_indices"].dtype == jnp.int32
    assert int(out["batch_size"]) == int(jnp.max(voxel_coords[:, 0])) + 1
    print("KERNEL_OK")
</pallas_src>

<mosaic_0001>
module attributes {stable_mosaic.version = 11 : i64} {
  func.func @_lambda_(%arg0: i32, %arg1: memref<64x128xf32, #tpu.memory_space<vmem>>, %arg2: memref<128x2048xf32, #tpu.memory_space<vmem>>, %arg3: memref<64x512xf32, #tpu.memory_space<vmem>>) attributes {dimension_semantics = [#tpu.dimension_semantics<parallel>], iteration_bounds = array<i64: 2>, scalar_prefetch = 0 : i64, scratch_operands = 0 : i64, tpu.core_type = #tpu.core_type<tc>, window_params = [{transform_indices = @transform_0, window_bounds = array<i64: 64, 128>}, {pipeline_mode = #tpu.pipeline_mode<synchronous>, transform_indices = @transform_1, window_bounds = array<i64: 128, 2048>}, {transform_indices = @transform_2, window_bounds = array<i64: 64, 512>}]} {
    %c0 = arith.constant 0 : index
    %c0_0 = arith.constant 0 : index
    %0 = vector.load %arg1[%c0, %c0_0] : memref<64x128xf32, #tpu.memory_space<vmem>>, vector<64x128xf32>
    %c0_1 = arith.constant 0 : index
    %c0_2 = arith.constant 0 : index
    %1 = vector.load %arg2[%c0_1, %c0_2] : memref<128x2048xf32, #tpu.memory_space<vmem>>, vector<128x512xf32>
    %cst = arith.constant dense<0.000000e+00> : vector<64x512xf32>
    %2 = tpu.matmul %0, %1, %cst {dimension_numbers = #tpu.dot_dimension_numbers<[1], [0], [0], [1], [0, 0, 1, 1], [], []>} : vector<64x128xf32>, vector<128x512xf32>, vector<64x512xf32> -> vector<64x512xf32>
    %c0_3 = arith.constant 0 : index
    %c512 = arith.constant 512 : index
    %3 = vector.load %arg2[%c0_3, %c512] : memref<128x2048xf32, #tpu.memory_space<vmem>>, vector<128x512xf32>
    %cst_4 = arith.constant dense<0.000000e+00> : vector<64x512xf32>
    %4 = tpu.matmul %0, %3, %cst_4 {dimension_numbers = #tpu.dot_dimension_numbers<[1], [0], [0], [1], [0, 0, 1, 1], [], []>} : vector<64x128xf32>, vector<128x512xf32>, vector<64x512xf32> -> vector<64x512xf32>
    %5 = arith.maximumf %2, %4 : vector<64x512xf32>
    %c0_5 = arith.constant 0 : index
    %c1024 = arith.constant 1024 : index
    %6 = vector.load %arg2[%c0_5, %c1024] : memref<128x2048xf32, #tpu.memory_space<vmem>>, vector<128x512xf32>
    %cst_6 = arith.constant dense<0.000000e+00> : vector<64x512xf32>
    %7 = tpu.matmul %0, %6, %cst_6 {dimension_numbers = #tpu.dot_dimension_numbers<[1], [0], [0], [1], [0, 0, 1, 1], [], []>} : vector<64x128xf32>, vector<128x512xf32>, vector<64x512xf32> -> vector<64x512xf32>
    %8 = arith.maximumf %5, %7 : vector<64x512xf32>
    %c0_7 = arith.constant 0 : index
    %c1536 = arith.constant 1536 : index
    %9 = vector.load %arg2[%c0_7, %c1536] : memref<128x2048xf32, #tpu.memory_space<vmem>>, vector<128x512xf32>
    %cst_8 = arith.constant dense<0.000000e+00> : vector<64x512xf32>
    %10 = tpu.matmul %0, %9, %cst_8 {dimension_numbers = #tpu.dot_dimension_numbers<[1], [0], [0], [1], [0, 0, 1, 1], [], []>} : vector<64x128xf32>, vector<128x512xf32>, vector<64x512xf32> -> vector<64x512xf32>
    %11 = arith.maximumf %8, %10 : vector<64x512xf32>
    %c0_9 = arith.constant 0 : index
    %c0_10 = arith.constant 0 : index
    %12 = vector.load %arg3[%c0_9, %c0_10] : memref<64x512xf32, #tpu.memory_space<vmem>>, vector<64x512xf32>
    tpu.vector_store %arg3[%c0_9, %c0_10], %11 {strides = array<i32>} : memref<64x512xf32, #tpu.memory_space<vmem>>, vector<64x512xf32>,
    return
  }
  func.func @transform_0(%arg0: i32) -> (i32, i32) {
    %c0_i32 = arith.constant 0 : i32
    %c0_i32_0 = arith.constant 0 : i32
    return %arg0, %c0_i32 : i32, i32
  }
  func.func @transform_1(%arg0: i32) -> (i32, i32) {
    %c0_i32 = arith.constant 0 : i32
    %c0_i32_0 = arith.constant 0 : i32
    %c0_i32_1 = arith.constant 0 : i32
    return %c0_i32, %c0_i32_0 : i32, i32
  }
  func.func @transform_2(%arg0: i32) -> (i32, i32) {
    %c0_i32 = arith.constant 0 : i32
    %c0_i32_0 = arith.constant 0 : i32
    return %arg0, %c0_i32 : i32, i32
  }
}

</mosaic_0001>

<llo_original>
// kernel: tpu_custom_call.1
$region0: #{tpu_custom_call.1}
  #allocation0 [shape = 'u32[]', space=smem, size = 0x4, offset = 0x4, fixed_abs, tag = 'smem constant byte address 0x4 - core index']
  #allocation1 [shape = 'u32[144,128]{1,0:T(1,128)}', space=vmem, size = 0x12000, scoped, tag = 'internal scratch']
  %s0 = inlined_call_operand.hbm [shape: f32[125,128], index: 0, kind: input, shape index: {}]
  %s1 = inlined_call_operand.hbm [shape: f32[128,2048], index: 1, kind: input, shape index: {}]
  %s2 = inlined_call_operand.hbm [shape: f32[125,512], index: 2, kind: output, shape index: {}]
  %s3 = sld [smem:[#allocation0]]
  $region49: #{tpu_custom_call.1} parent=0
    _
  %s5 = ssub.s32 1, %s3
  %s6 = scalar_select 0, %s5, %s3
  $region1: #{tpu_custom_call.1} parent=0
    #allocation2 [shape = 'u8[65536]{0}', space=vmem, size = 0x10000, scoped, tag = 'input window, operand 0']
    #allocation3 [shape = 's32[2]{0}', space=sflag, size = 0x8, scoped, tag = 'scoped memory for tpu_custom_call.1']
    #allocation4 [shape = 's32[2]{0}', space=sflag, size = 0x8, scoped, tag = 'scoped memory for tpu_custom_call.1']
    #allocation5 [shape = 'u8[1048576]{0}', space=vmem, size = 0x100000, scoped, tag = 'input window, operand 1, single buffered']
    #allocation6 [shape = 's32[1]{0}', space=sflag, size = 0x4, scoped, tag = 'scoped memory for tpu_custom_call.1']
    #allocation7 [shape = 'u8[262144]{0}', space=vmem, size = 0x40000, scoped, tag = 'output window, operand 0']
    %7 = vsyncpa [#allocation3], 0
    %s8 = scalar_lea.sflag [#allocation3], 1
    %9 = vsyncpa %s8, 0
    %10 = vsyncpa [#allocation6], 0
    %11 = vsyncpa [#allocation4], 0
    %s12 = scalar_lea.sflag [#allocation4], 1
    %13 = vsyncpa %s12, 0
    loop: start=0, step=1, limit=4
    $region2: #{tpu_custom_call.1} parent=1 // loop_pre_header
      _
    $region3: #{tpu_custom_call.1} parent=1 // loop_header
      %s15 = sphi 0, %s19
      %p16 = scmp.ge.s32.totalorder %s15, 4
      %s25 = sphi 0, %s27
      %s28 = sphi 0, %s25
      %s29 = sphi 0, %s28
      %s45 = sphi 0, %s29
      %s49 = sphi 0, %s49
      %s51 = sphi 0, %s49
      %s52 = sphi 0, %s51
      %s66 = sphi 0, %s52
      %s72 = sphi 0, %s74
      %s75 = sphi 0, %s72
      %s76 = sphi 0, %s75
      %s92 = sphi 0, %s76
    $region4: #{tpu_custom_call.1} parent=1 // loop_header_branch
      %18 = sbr.rel (%p16) target = $region8
    $region5: #{tpu_custom_call.1} parent=1 // loop_body
      %s20 = ssub.s32 %s15, 1
      %s21 = ssub.s32 %s15, 2
      %s22 = sadd.s32 %s15, 1
      %s23 = ssub.s32 %s15, %s22
      %p24 = scmp.eq.s32.totalorder %s23, 0
      %s26 = sadd.s32 %s25, 1
      %s27 = scalar_select %p24, %s25, %s26
      %p30 = pneg %p24
      %p31 = scmp.eq.s32.totalorder %s15, 1
      %p32 = por %p30, %p31
      %p33 = scmp.ne.s32.totalorder %s25, %s28
      %p34 = scmp.eq.s32.totalorder %s15, 0
      %p35 = por %p33, %p34
      %p36 = scmp.ne.s32.totalorder %s25, %s28
      %p37 = scmp.eq.s32.totalorder %s20, 1
      %p38 = por %p36, %p37
      %p39 = scmp.ne.s32.totalorder %s28, %s29
      %p40 = scmp.eq.s32.totalorder %s20, 0
      %p41 = por %p39, %p40
      %p42 = scmp.ne.s32.totalorder %s28, %s29
      %p43 = scmp.eq.s32.totalorder %s21, 1
      %p44 = por %p42, %p43
      %p46 = scmp.ne.s32.totalorder %s29, %s45
      %p47 = scmp.eq.s32.totalorder %s21, 0
      %p48 = por %p46, %p47
      %s50 = sadd.s32 %s49, 1
      %p53 = scmp.eq.s32.totalorder %s15, 1
      %p54 = scmp.ne.s32.totalorder %s49, %s51
      %p55 = scmp.eq.s32.totalorder %s15, 0
      %p56 = por %p54, %p55
      %p57 = scmp.ne.s32.totalorder %s49, %s51
      %p58 = scmp.eq.s32.totalorder %s20, 1
      %p59 = por %p57, %p58
      %p60 = scmp.ne.s32.totalorder %s51, %s52
      %p61 = scmp.eq.s32.totalorder %s20, 0
      %p62 = por %p60, %p61
      %p63 = scmp.ne.s32.totalorder %s51, %s52
      %p64 = scmp.eq.s32.totalorder %s21, 1
      %p65 = por %p63, %p64
      %p67 = scmp.ne.s32.totalorder %s52, %s66
      %p68 = scmp.eq.s32.totalorder %s21, 0
      %p69 = por %p67, %p68
      %s70 = ssub.s32 %s15, %s22
      %p71 = scmp.eq.s32.totalorder %s70, 0
      %s73 = sadd.s32 %s72, 1
      %s74 = scalar_select %p71, %s72, %s73
      %p77 = pneg %p71
      %p78 = scmp.eq.s32.totalorder %s15, 1
      %p79 = por %p77, %p78
      %p80 = scmp.ne.s32.totalorder %s72, %s75
      %p81 = scmp.eq.s32.totalorder %s15, 0
      %p82 = por %p80, %p81
      %p83 = scmp.ne.s32.totalorder %s72, %s75
      %p84 = scmp.eq.s32.totalorder %s20, 1
      %p85 = por %p83, %p84
      %p86 = scmp.ne.s32.totalorder %s75, %s76
      %p87 = scmp.eq.s32.totalorder %s20, 0
      %p88 = por %p86, %p87
      %p89 = scmp.ne.s32.totalorder %s75, %s76
      %p90 = scmp.eq.s32.totalorder %s21, 1
      %p91 = por %p89, %p90
      %p93 = scmp.ne.s32.totalorder %s76, %s92
      %p94 = scmp.eq.s32.totalorder %s21, 0
      %p95 = por %p93, %p94
      %p96 = scmp.le.s32.totalorder 1, %s15
      %p97 = scmp.lt.s32.totalorder %s15, 3
      %p98 = pnand %p96, %p97
      %p99 = pneg %p98
      // Predicated region
      $region9: #{tpu_custom_call.1} parent=5 // pred_check
        _
      $region10: #{tpu_custom_call.1} parent=5 // pred_check_branch
        %101 = sbr.rel (%p98) target = $region12
      $region11: #{tpu_custom_call.1} parent=5 // pred_region
        %s102 = ssub.s32 %s15, 1
        // Predicated region
        $region13: #{tpu_custom_call.1} parent=11 // pred_check
          %p103 = pneg %p62
        $region14: #{tpu_custom_call.1} parent=11 // pred_check_branch
          %105 = sbr.rel (%p103) target = $region16
        $region15: #{tpu_custom_call.1} parent=11 // pred_region
          %s107 = ssub.s32 32768, 32768
          %108 = vsyncadd [#allocation6], %s107
          %s109 = sshll.u32 [#allocation5], 4
          %s110 = int_to_ptr.vmem [resolvable:$true] %s109
          %115 = dma.hbm_to_vmem [thread:$0]  %s1, 32768, %s110, [#allocation6], 2048, 2048, 128
        $region16: #{tpu_custom_call.1} parent=11 // pred_fallthru
          _
      $region12: #{tpu_custom_call.1} parent=5 // pred_fallthru
        _
      %p116 = scmp.lt.s32.totalorder %s15, 2
      // Predicated region
      $region17: #{tpu_custom_call.1} parent=5 // pred_check
        %p117 = pneg %p116
      $region18: #{tpu_custom_call.1} parent=5 // pred_check_branch
        %119 = sbr.rel (%p117) target = $region20
      $region19: #{tpu_custom_call.1} parent=5 // pred_region
        // Predicated region
        $region21: #{tpu_custom_call.1} parent=19 // pred_check
          %p120 = pneg %p35
        $region22: #{tpu_custom_call.1} parent=19 // pred_check_branch
          %122 = sbr.rel (%p120) target = $region24
        $region23: #{tpu_custom_call.1} parent=19 // pred_region
          %s123 = sand.u32 %s25, 1
          %s124 = scalar_lea.sflag [#allocation3], %s123
          %s125 = sand.u32 %s25, 1
          %s126 = smul.addr %s125, 64
          %s127 = scalar_lea.vmem [#allocation2], %s126
          %s128 = smul.u32 8, %s15
          %s130 = ssub.s32 1024, 1024
          %131 = vsyncadd %s124, %s130
          %s132 = smul.addr %s128, 128
          %s133 = scalar_lea.hbm %s0, %s132
          %s134 = sshll.u32 %s127, 4
          %s135 = int_to_ptr.vmem [resolvable:$true] %s134
          %140 = dma.hbm_to_vmem [thread:$0]  %s133, 1024, %s135, %s124, 128, 128, 8
        $region24: #{tpu_custom_call.1} parent=19 // pred_fallthru
          _
      $region20: #{tpu_custom_call.1} parent=5 // pred_fallthru
        _
      %p141 = scmp.le.s32.totalorder 1, %s15
      %p142 = scmp.lt.s32.totalorder %s15, 3
      %p143 = pnand %p141, %p142
      %p144 = pneg %p143
      // Predicated region
      $region25: #{tpu_custom_call.1} parent=5 // pred_check
        _
      $region26: #{tpu_custom_call.1} parent=5 // pred_check_branch
        %146 = sbr.rel (%p143) target = $region28
      $region27: #{tpu_custom_call.1} parent=5 // pred_region
        %s147 = ssub.s32 %s15, 1
        %s148 = sand.u32 %s28, 1
        %s149 = scalar_lea.sflag [#allocation3], %s148
        %s150 = sand.u32 %s28, 1
        %s151 = smul.addr %s150, 64
        %s152 = scalar_lea.vmem [#allocation2], %s151
        // Predicated region
        $region29: #{tpu_custom_call.1} parent=27 // pred_check
          %p153 = pneg %p41
        $region30: #{tpu_custom_call.1} parent=27 // pred_check_branch
          %155 = sbr.rel (%p153) target = $region32
        $region31: #{tpu_custom_call.1} parent=27 // pred_region
          %156 = dma.done %s149, 1024
        $region32: #{tpu_custom_call.1} parent=27 // pred_fallthru
          _
        // Predicated region
        $region33: #{tpu_custom_call.1} parent=27 // pred_check
          %p157 = pneg %p62
        $region34: #{tpu_custom_call.1} parent=27 // pred_check_branch
          %159 = sbr.rel (%p157) target = $region36
        $region35: #{tpu_custom_call.1} parent=27 // pred_region
          %160 = dma.done [#allocation6], 32768
        $region36: #{tpu_custom_call.1} parent=27 // pred_fallthru
          _
        %s161 = sand.u32 %s28, 1
        %s162 = scalar_lea.sflag [#allocation3], %s161
        %s163 = sand.u32 %s28, 1
        %s164 = smul.addr %s163, 64
        %s165 = scalar_lea.vmem [#allocation2], %s164
        %p166 = pneg %p41
        %p167 = pneg %p38
        %p168 = pneg %p62
        %p169 = pneg %p59
        %p170 = pneg %p88
        %p171 = pneg %p85
        %s172 = sand.u32 %s75, 1
        %s173 = scalar_lea.sflag [#allocation4], %s172
        %s174 = sand.u32 %s75, 1
        %s175 = smul.addr %s174, 256
        %s176 = scalar_lea.vmem [#allocation7], %s175
        %s177 = smul.u32 8, %s20
        %s178 = smul.u32 8, %s20
        %v179 = vld [vmem:[%s152] sm:$0xff]
        %v180 = vld [vmem:[%s152 + $0x8] sm:$0xff]
        %v181 = vld [vmem:[%s152 + $0x10] sm:$0xff]
        %v182 = vld [vmem:[%s152 + $0x18] sm:$0xff]
        %v183 = vld [vmem:[%s152 + $0x20] sm:$0xff]
        %v184 = vld [vmem:[%s152 + $0x28] sm:$0xff]
        %v185 = vld [vmem:[%s152 + $0x30] sm:$0xff]
        %v186 = vld [vmem:[%s152 + $0x38] sm:$0xff]
        %v187 = vld [vmem:[#allocation5] sm:$0xff]
        %v188 = vld [vmem:[#allocation5 + $0x8] sm:$0xff]
        %v189 = vld [vmem:[#allocation5 + $0x10] sm:$0xff]
        %v190 = vld [vmem:[#allocation5 + $0x18] sm:$0xff]
        %v191 = vld [vmem:[#allocation5 + $0x80] sm:$0xff]
        %v192 = vld [vmem:[#allocation5 + $0x88] sm:$0xff]
        %v193 = vld [vmem:[#allocation5 + $0x90] sm:$0xff]
        %v194 = vld [vmem:[#allocation5 + $0x98] sm:$0xff]
        %v195 = vld [vmem:[#allocation5 + $0x100] sm:$0xff]
        %v196 = vld [vmem:[#allocation5 + $0x108] sm:$0xff]
        %v197 = vld [vmem:[#allocation5 + $0x110] sm:$0xff]
        %v198 = vld [vmem:[#allocation5 + $0x118] sm:$0xff]
        %v199 = vld [vmem:[#allocation5 + $0x180] sm:$0xff]
        %v200 = vld [vmem:[#allocation5 + $0x188] sm:$0xff]
        %v201 = vld [vmem:[#allocation5 + $0x190] sm:$0xff]
        %v202 = vld [vmem:[#allocation5 + $0x198] sm:$0xff]
        %v203 = vld [vmem:[#allocation5 + $0x200] sm:$0xff]
        %v204 = vld [vmem:[#allocation5 + $0x208] sm:$0xff]
        %v205 = vld [vmem:[#allocation5 + $0x210] sm:$0xff]
        %v206 = vld [vmem:[#allocation5 + $0x218] sm:$0xff]
        %v207 = vld [vmem:[#allocation5 + $0x280] sm:$0xff]
        %v208 = vld [vmem:[#allocation5 + $0x288] sm:$0xff]
        %v209 = vld [vmem:[#allocation5 + $0x290] sm:$0xff]
        %v210 = vld [vmem:[#allocation5 + $0x298] sm:$0xff]
        %v211 = vld [vmem:[#allocation5 + $0x300] sm:$0xff]
        %v212 = vld [vmem:[#allocation5 + $0x308] sm:$0xff]
        %v213 = vld [vmem:[#allocation5 + $0x310] sm:$0xff]
        %v214 = vld [vmem:[#allocation5 + $0x318] sm:$0xff]
        %v215 = vld [vmem:[#allocation5 + $0x380] sm:$0xff]
        %v216 = vld [vmem:[#allocation5 + $0x388] sm:$0xff]
        %v217 = vld [vmem:[#allocation5 + $0x390] sm:$0xff]
        %v218 = vld [vmem:[#allocation5 + $0x398] sm:$0xff]
        %v219 = vld [vmem:[#allocation5 + $0x400] sm:$0xff]
        %v220 = vld [vmem:[#allocation5 + $0x408] sm:$0xff]
        %v221 = vld [vmem:[#allocation5 + $0x410] sm:$0xff]
        %v222 = vld [vmem:[#allocation5 + $0x418] sm:$0xff]
        %v223 = vld [vmem:[#allocation5 + $0x480] sm:$0xff]
        %v224 = vld [vmem:[#allocation5 + $0x488] sm:$0xff]
        %v225 = vld [vmem:[#allocation5 + $0x490] sm:$0xff]
        %v226 = vld [vmem:[#allocation5 + $0x498] sm:$0xff]
        %v227 = vld [vmem:[#allocation5 + $0x500] sm:$0xff]
        %v228 = vld [vmem:[#allocation5 + $0x508] sm:$0xff]
        %v229 = vld [vmem:[#allocation5 + $0x510] sm:$0xff]
        %v230 = vld [vmem:[#allocation5 + $0x518] sm:$0xff]
        %v231 = vld [vmem:[#allocation5 + $0x580] sm:$0xff]
        %v232 = vld [vmem:[#allocation5 + $0x588] sm:$0xff]
        %v233 = vld [vmem:[#allocation5 + $0x590] sm:$0xff]
        %v234 = vld [vmem:[#allocation5 + $0x598] sm:$0xff]
        %v235 = vld [vmem:[#allocation5 + $0x600] sm:$0xff]
        %v236 = vld [vmem:[#allocation5 + $0x608] sm:$0xff]
        %v237 = vld [vmem:[#allocation5 + $0x610] sm:$0xff]
        %v238 = vld [vmem:[#allocation5 + $0x618] sm:$0xff]
        %v239 = vld [vmem:[#allocation5 + $0x680] sm:$0xff]
        %v240 = vld [vmem:[#allocation5 + $0x688] sm:$0xff]
        %v241 = vld [vmem:[#allocation5 + $0x690] sm:$0xff]
        %v242 = vld [vmem:[#allocation5 + $0x698] sm:$0xff]
        %v243 = vld [vmem:[#allocation5 + $0x700] sm:$0xff]
        %v244 = vld [vmem:[#allocation5 + $0x708] sm:$0xff]
        %v245 = vld [vmem:[#allocation5 + $0x710] sm:$0xff]
        %v246 = vld [vmem:[#allocation5 + $0x718] sm:$0xff]
        %v247 = vld [vmem:[#allocation5 + $0x780] sm:$0xff]
        %v248 = vld [vmem:[#allocation5 + $0x788] sm:$0xff]
        %v249 = vld [vmem:[#allocation5 + $0x790] sm:$0xff]
        %v250 = vld [vmem:[#allocation5 + $0x798] sm:$0xff]
        %251 = vmatprep.subr.mxu0 %v248
        %252 = vmatpush1.msra.mxu0 %v247
        %253 = vmatprep.subr.mxu0 %v244
        %254 = vmatpush1.msra.mxu0 %v243
        %255 = vmatprep.subr.mxu0 %v240
        %256 = vmatpush1.msra.mxu0 %v239
        %257 = vmatprep.subr.mxu0 %v236
        %258 = vmatpush1.msra.mxu0 %v235
        %259 = vmatprep.subr.mxu0 %v232
        %260 = vmatpush1.msra.mxu0 %v231
        %261 = vmatprep.subr.mxu0 %v228
        %262 = vmatpush1.msra.mxu0 %v227
        %263 = vmatprep.subr.mxu0 %v224
        %264 = vmatpush1.msra.mxu0 %v223
        %265 = vmatprep.subr.mxu0 %v220
        %266 = vmatpush1.msra.mxu0 %v219
        %267 = vmatprep.subr.mxu0 %v216
        %268 = vmatpush1.msra.mxu0 %v215
        %269 = vmatprep.subr.mxu0 %v212
        %270 = vmatpush1.msra.mxu0 %v211
        %271 = vmatprep.subr.mxu0 %v208
        %272 = vmatpush1.msra.mxu0 %v207
        %273 = vmatprep.subr.mxu0 %v204
        %274 = vmatpush1.msra.mxu0 %v203
        %275 = vmatprep.subr.mxu0 %v200
        %276 = vmatpush1.msra.mxu0 %v199
        %277 = vmatprep.subr.mxu0 %v196
        %278 = vmatpush1.msra.mxu0 %v195
        %279 = vmatprep.subr.mxu0 %v192
        %280 = vmatpush1.msra.mxu0 %v191
        %281 = vmatprep.subr.mxu0 %v188
        %282 = vmatpush1.msra.mxu0 %v187
        %283 = vmatprep.subr.mxu0 0.0
        %284 = vmatpush2.msra.mxu0 0.0
        %285 = vmatprep.subr.mxu0 0.0
        %286 = vmatpush2.msra.mxu0 0.0
        %287 = vmatprep.subr.mxu0 0.0
        %288 = vmatpush2.msra.mxu0 0.0
        %289 = vmatprep.subr.mxu0 0.0
        %290 = vmatpush2.msra.mxu0 0.0
        %291 = vmatprep.subr.mxu0 0.0
        %292 = vmatpush2.msra.mxu0 0.0
        %293 = vmatprep.subr.mxu0 0.0
        %294 = vmatpush2.msra.mxu0 0.0
        %295 = vmatprep.subr.mxu0 0.0
        %296 = vmatpush2.msra.mxu0 0.0
        %297 = vmatprep.subr.mxu0 0.0
        %298 = vmatpush2.msra.mxu0 0.0
        %299 = vmatprep.subr.mxu0 0.0
        %300 = vmatpush2.msra.mxu0 0.0
        %301 = vmatprep.subr.mxu0 0.0
        %302 = vmatpush2.msra.mxu0 0.0
        %303 = vmatprep.subr.mxu0 0.0
        %304 = vmatpush2.msra.mxu0 0.0
        %305 = vmatprep.subr.mxu0 0.0
        %306 = vmatpush2.msra.mxu0 0.0
        %307 = vmatprep.subr.mxu0 0.0
        %308 = vmatpush2.msra.mxu0 0.0
        %309 = vmatprep.subr.mxu0 0.0
        %310 = vmatpush2.msra.mxu0 0.0
        %311 = vmatprep.subr.mxu0 0.0
        %312 = vmatpush2.msra.mxu0 0.0
        %313 = vmatprep.subr.mxu0 0.0
        %314 = vmatpush2.msra.mxu0 0.0
        %315 = vmatprep.mubr.f32.mxu0 0.0
        %316 = vmatmul.mubr.f32.gmra.mxu0 %v179
        %v317 = vpop.f32.mrf.mxu0
        %v318 = vadd.f32 0.0, %v317
        %v319 = vpop.f32.mrf.mxu0
        %v320 = vadd.f32 0.0, %v319
        %321 = vmatprep.mubr.f32.mxu0 0.0
        %322 = vmatmul.mubr.f32.gmra.mxu0 %v180
        %v323 = vpop.f32.mrf.mxu0
        %v324 = vadd.f32 0.0, %v323
        %v325 = vpop.f32.mrf.mxu0
        %v326 = vadd.f32 0.0, %v325
        %327 = vmatprep.mubr.f32.mxu0 0.0
        %328 = vmatmul.mubr.f32.gmra.mxu0 %v181
        %v329 = vpop.f32.mrf.mxu0
        %v330 = vadd.f32 0.0, %v329
        %v331 = vpop.f32.mrf.mxu0
        %v332 = vadd.f32 0.0, %v331
        %333 = vmatprep.mubr.f32.mxu0 0.0
        %334 = vmatmul.mubr.f32.gmra.mxu0 %v182
        %v335 = vpop.f32.mrf.mxu0
        %v336 = vadd.f32 0.0, %v335
        %v337 = vpop.f32.mrf.mxu0
        %v338 = vadd.f32 0.0, %v337
        %339 = vmatprep.mubr.f32.mxu0 0.0
        %340 = vmatmul.mubr.f32.gmra.mxu0 %v183
        %v341 = vpop.f32.mrf.mxu0
        %v342 = vadd.f32 0.0, %v341
        %v343 = vpop.f32.mrf.mxu0
        %v344 = vadd.f32 0.0, %v343
        %345 = vmatprep.mubr.f32.mxu0 0.0
        %346 = vmatmul.mubr.f32.gmra.mxu0 %v184
        %v347 = vpop.f32.mrf.mxu0
        %v348 = vadd.f32 0.0, %v347
        %v349 = vpop.f32.mrf.mxu0
        %v350 = vadd.f32 0.0, %v349
        %351 = vmatprep.mubr.f32.mxu0 0.0
        %352 = vmatmul.mubr.f32.gmra.mxu0 %v185
        %v353 = vpop.f32.mrf.mxu0
        %v354 = vadd.f32 0.0, %v353
        %v355 = vpop.f32.mrf.mxu0
        %v356 = vadd.f32 0.0, %v355
        %357 = vmatprep.mubr.f32.mxu0 0.0
        %358 = vmatmul.mubr.f32.gmra.mxu0 %v186
        %v359 = vpop.f32.mrf.mxu0
        %v360 = vadd.f32 0.0, %v359
        %v361 = vpop.f32.mrf.mxu0
        %v362 = vadd.f32 0.0, %v361
        %363 = vdwg.mxu0
        %364 = vmatprep.subr.mxu0 %v250
        %365 = vmatpush1.msra.mxu0 %v249
        %366 = vmatprep.subr.mxu0 %v246
        %367 = vmatpush1.msra.mxu0 %v245
        %368 = vmatprep.subr.mxu0 %v242
        %369 = vmatpush1.msra.mxu0 %v241
        %370 = vmatprep.subr.mxu0 %v238
        %371 = vmatpush1.msra.mxu0 %v237
        %372 = vmatprep.subr.mxu0 %v234
        %373 = vmatpush1.msra.mxu0 %v233
        %374 = vmatprep.subr.mxu0 %v230
        %375 = vmatpush1.msra.mxu0 %v229
        %376 = vmatprep.subr.mxu0 %v226
        %377 = vmatpush1.msra.mxu0 %v225
        %378 = vmatprep.subr.mxu0 %v222
        %379 = vmatpush1.msra.mxu0 %v221
        %380 = vmatprep.subr.mxu0 %v218
        %381 = vmatpush1.msra.mxu0 %v217
        %382 = vmatprep.subr.mxu0 %v214
        %383 = vmatpush1.msra.mxu0 %v213
        %384 = vmatprep.subr.mxu0 %v210
        %385 = vmatpush1.msra.mxu0 %v209
        %386 = vmatprep.subr.mxu0 %v206
        %387 = vmatpush1.msra.mxu0 %v205
        %388 = vmatprep.subr.mxu0 %v202
        %389 = vmatpush1.msra.mxu0 %v201
        %390 = vmatprep.subr.mxu0 %v198
        %391 = vmatpush1.msra.mxu0 %v197
        %392 = vmatprep.subr.mxu0 %v194
        %393 = vmatpush1.msra.mxu0 %v193
        %394 = vmatprep.subr.mxu0 %v190
        %395 = vmatpush1.msra.mxu0 %v189
        %396 = vmatprep.subr.mxu0 0.0
        %397 = vmatpush2.msra.mxu0 0.0
        %398 = vmatprep.subr.mxu0 0.0
        %399 = vmatpush2.msra.mxu0 0.0
        %400 = vmatprep.subr.mxu0 0.0
        %401 = vmatpush2.msra.mxu0 0.0
        %402 = vmatprep.subr.mxu0 0.0
        %403 = vmatpush2.msra.mxu0 0.0
        %404 = vmatprep.subr.mxu0 0.0
        %405 = vmatpush2.msra.mxu0 0.0
        %406 = vmatprep.subr.mxu0 0.0
        %407 = vmatpush2.msra.mxu0 0.0
        %408 = vmatprep.subr.mxu0 0.0
        %409 = vmatpush2.msra.mxu0 0.0
        %410 = vmatprep.subr.mxu0 0.0
        %411 = vmatpush2.msra.mxu0 0.0
        %412 = vmatprep.subr.mxu0 0.0
        %413 = vmatpush2.msra.mxu0 0.0
        %414 = vmatprep.subr.mxu0 0.0
        %415 = vmatpush2.msra.mxu0 0.0
        %416 = vmatprep.subr.mxu0 0.0
        %417 = vmatpush2.msra.mxu0 0.0
        %418 = vmatprep.subr.mxu0 0.0
        %419 = vmatpush2.msra.mxu0 0.0
        %420 = vmatprep.subr.mxu0 0.0
        %421 = vmatpush2.msra.mxu0 0.0
        %422 = vmatprep.subr.mxu0 0.0
        %423 = vmatpush2.msra.mxu0 0.0
        %424 = vmatprep.subr.mxu0 0.0
        %425 = vmatpush2.msra.mxu0 0.0
        %426 = vmatprep.subr.mxu0 0.0
        %427 = vmatpush2.msra.mxu0 0.0
        %428 = vmatprep.mubr.f32.mxu0 0.0
        %429 = vmatmul.mubr.f32.gmra.mxu0 %v179
        %v430 = vpop.f32.mrf.mxu0
        %v431 = vadd.f32 0.0, %v430
        %v432 = vpop.f32.mrf.mxu0
        %v433 = vadd.f32 0.0, %v432
        %434 = vmatprep.mubr.f32.mxu0 0.0
        %435 = vmatmul.mubr.f32.gmra.mxu0 %v180
        %v436 = vpop.f32.mrf.mxu0
        %v437 = vadd.f32 0.0, %v436
        %v438 = vpop.f32.mrf.mxu0
        %v439 = vadd.f32 0.0, %v438
        %440 = vmatprep.mubr.f32.mxu0 0.0
        %441 = vmatmul.mubr.f32.gmra.mxu0 %v181
        %v442 = vpop.f32.mrf.mxu0
        %v443 = vadd.f32 0.0, %v442
        %v444 = vpop.f32.mrf.mxu0
        %v445 = vadd.f32 0.0, %v444
        %446 = vmatprep.mubr.f32.mxu0 0.0
        %447 = vmatmul.mubr.f32.gmra.mxu0 %v182
        %v448 = vpop.f32.mrf.mxu0
        %v449 = vadd.f32 0.0, %v448
        %v450 = vpop.f32.mrf.mxu0
        %v451 = vadd.f32 0.0, %v450
        %452 = vmatprep.mubr.f32.mxu0 0.0
        %453 = vmatmul.mubr.f32.gmra.mxu0 %v183
        %v454 = vpop.f32.mrf.mxu0
        %v455 = vadd.f32 0.0, %v454
        %v456 = vpop.f32.mrf.mxu0
        %v457 = vadd.f32 0.0, %v456
        %458 = vmatprep.mubr.f32.mxu0 0.0
        %459 = vmatmul.mubr.f32.gmra.mxu0 %v184
        %v460 = vpop.f32.mrf.mxu0
        %v461 = vadd.f32 0.0, %v460
        %v462 = vpop.f32.mrf.mxu0
        %v463 = vadd.f32 0.0, %v462
        %464 = vmatprep.mubr.f32.mxu0 0.0
        %465 = vmatmul.mubr.f32.gmra.mxu0 %v185
        %v466 = vpop.f32.mrf.mxu0
        %v467 = vadd.f32 0.0, %v466
        %v468 = vpop.f32.mrf.mxu0
        %v469 = vadd.f32 0.0, %v468
        %470 = vmatprep.mubr.f32.mxu0 0.0
        %471 = vmatmul.mubr.f32.gmra.mxu0 %v186
        %v472 = vpop.f32.mrf.mxu0
        %v473 = vadd.f32 0.0, %v472
        %v474 = vpop.f32.mrf.mxu0
        %v475 = vadd.f32 0.0, %v474
        %476 = vdwg.mxu0
        %v477 = vld [vmem:[#allocation5 + $0x20] sm:$0xff]
        %v478 = vld [vmem:[#allocation5 + $0x28] sm:$0xff]
        %v479 = vld [vmem:[#allocation5 + $0x30] sm:$0xff]
        %v480 = vld [vmem:[#allocation5 + $0x38] sm:$0xff]
        %v481 = vld [vmem:[#allocation5 + $0xa0] sm:$0xff]
        %v482 = vld [vmem:[#allocation5 + $0xa8] sm:$0xff]
        %v483 = vld [vmem:[#allocation5 + $0xb0] sm:$0xff]
        %v484 = vld [vmem:[#allocation5 + $0xb8] sm:$0xff]
        %v485 = vld [vmem:[#allocation5 + $0x120] sm:$0xff]
        %v486 = vld [vmem:[#allocation5 + $0x128] sm:$0xff]
        %v487 = vld [vmem:[#allocation5 + $0x130] sm:$0xff]
        %v488 = vld [vmem:[#allocation5 + $0x138] sm:$0xff]
        %v489 = vld [vmem:[#allocation5 + $0x1a0] sm:$0xff]
        %v490 = vld [vmem:[#allocation5 + $0x1a8] sm:$0xff]
        %v491 = vld [vmem:[#allocation5 + $0x1b0] sm:$0xff]
        %v492 = vld [vmem:[#allocation5 + $0x1b8] sm:$0xff]
        %v493 = vld [vmem:[#allocation5 + $0x220] sm:$0xff]
        %v494 = vld [vmem:[#allocation5 + $0x228] sm:$0xff]
        %v495 = vld [vmem:[#allocation5 + $0x230] sm:$0xff]
        %v496 = vld [vmem:[#allocation5 + $0x238] sm:$0xff]
        %v497 = vld [vmem:[#allocation5 + $0x2a0] sm:$0xff]
        %v498 = vld [vmem:[#allocation5 + $0x2a8] sm:$0xff]
        %v499 = vld [vmem:[#allocation5 + $0x2b0] sm:$0xff]
        %v500 = vld [vmem:[#allocation5 + $0x2b8] sm:$0xff]
        %v501 = vld [vmem:[#allocation5 + $0x320] sm:$0xff]
        %v502 = vld [vmem:[#allocation5 + $0x328] sm:$0xff]
        %v503 = vld [vmem:[#allocation5 + $0x330] sm:$0xff]
        %v504 = vld [vmem:[#allocation5 + $0x338] sm:$0xff]
        %v505 = vld [vmem:[#allocation5 + $0x3a0] sm:$0xff]
        %v506 = vld [vmem:[#allocation5 + $0x3a8] sm:$0xff]
        %v507 = vld [vmem:[#allocation5 + $0x3b0] sm:$0xff]
        %v508 = vld [vmem:[#allocation5 + $0x3b8] sm:$0xff]
        %v509 = vld [vmem:[#allocation5 + $0x420] sm:$0xff]
        %v510 = vld [vmem:[#allocation5 + $0x428] sm:$0xff]
        %v511 = vld [vmem:[#allocation5 + $0x430] sm:$0xff]
        %v512 = vld [vmem:[#allocation5 + $0x438] sm:$0xff]
        %v513 = vld [vmem:[#allocation5 + $0x4a0] sm:$0xff]
        %v514 = vld [vmem:[#allocation5 + $0x4a8] sm:$0xff]
        %v515 = vld [vmem:[#allocation5 + $0x4b0] sm:$0xff]
        %v516 = vld [vmem:[#allocation5 + $0x4b8] sm:$0xff]
        %v517 = vld [vmem:[#allocation5 + $0x520] sm:$0xff]
        %v518 = vld [vmem:[#allocation5 + $0x528] sm:$0xff]
        %v519 = vld [vmem:[#allocation5 + $0x530] sm:$0xff]
        %v520 = vld [vmem:[#allocation5 + $0x538] sm:$0xff]
        %v521 = vld [vmem:[#allocation5 + $0x5a0] sm:$0xff]
        %v522 = vld [vmem:[#allocation5 + $0x5a8] sm:$0xff]
        %v523 = vld [vmem:[#allocation5 + $0x5b0] sm:$0xff]
        %v524 = vld [vmem:[#allocation5 + $0x5b8] sm:$0xff]
        %v525 = vld [vmem:[#allocation5 + $0x620] sm:$0xff]
        %v526 = vld [vmem:[#allocation5 + $0x628] sm:$0xff]
        %v527 = vld [vmem:[#allocation5 + $0x630] sm:$0xff]
        %v528 = vld [vmem:[#allocation5 + $0x638] sm:$0xff]
        %v529 = vld [vmem:[#allocation5 + $0x6a0] sm:$0xff]
        %v530 = vld [vmem:[#allocation5 + $0x6a8] sm:$0xff]
        %v531 = vld [vmem:[#allocation5 + $0x6b0] sm:$0xff]
        %v532 = vld [vmem:[#allocation5 + $0x6b8] sm:$0xff]
        %v533 = vld [vmem:[#allocation5 + $0x720] sm:$0xff]
        %v534 = vld [vmem:[#allocation5 + $0x728] sm:$0xff]
        %v535 = vld [vmem:[#allocation5 + $0x730] sm:$0xff]
        %v536 = vld [vmem:[#allocation5 + $0x738] sm:$0xff]
        %v537 = vld [vmem:[#allocation5 + $0x7a0] sm:$0xff]
        %v538 = vld [vmem:[#allocation5 + $0x7a8] sm:$0xff]
        %v539 = vld [vmem:[#allocation5 + $0x7b0] sm:$0xff]
        %v540 = vld [vmem:[#allocation5 + $0x7b8] sm:$0xff]
        %541 = vmatprep.subr.mxu0 %v538
        %542 = vmatpush1.msra.mxu0 %v537
        %543 = vmatprep.subr.mxu0 %v534
        %544 = vmatpush1.msra.mxu0 %v533
        %545 = vmatprep.subr.mxu0 %v530
        %546 = vmatpush1.msra.mxu0 %v529
        %547 = vmatprep.subr.mxu0 %v526
        %548 = vmatpush1.msra.mxu0 %v525
        %549 = vmatprep.subr.mxu0 %v522
        %550 = vmatpush1.msra.mxu0 %v521
        %551 = vmatprep.subr.mxu0 %v518
        %552 = vmatpush1.msra.mxu0 %v517
        %553 = vmatprep.subr.mxu0 %v514
        %554 = vmatpush1.msra.mxu0 %v513
        %555 = vmatprep.subr.mxu0 %v510
        %556 = vmatpush1.msra.mxu0 %v509
        %557 = vmatprep.subr.mxu0 %v506
        %558 = vmatpush1.msra.mxu0 %v505
        %559 = vmatprep.subr.mxu0 %v502
        %560 = vmatpush1.msra.mxu0 %v501
        %561 = vmatprep.subr.mxu0 %v498
        %562 = vmatpush1.msra.mxu0 %v497
        %563 = vmatprep.subr.mxu0 %v494
        %564 = vmatpush1.msra.mxu0 %v493
        %565 = vmatprep.subr.mxu0 %v490
        %566 = vmatpush1.msra.mxu0 %v489
        %567 = vmatprep.subr.mxu0 %v486
        %568 = vmatpush1.msra.mxu0 %v485
        %569 = vmatprep.subr.mxu0 %v482
        %570 = vmatpush1.msra.mxu0 %v481
        %571 = vmatprep.subr.mxu0 %v478
        %572 = vmatpush1.msra.mxu0 %v477
        %573 = vmatprep.subr.mxu0 0.0
        %574 = vmatpush2.msra.mxu0 0.0
        %575 = vmatprep.subr.mxu0 0.0
        %576 = vmatpush2.msra.mxu0 0.0
        %577 = vmatprep.subr.mxu0 0.0
        %578 = vmatpush2.msra.mxu0 0.0
        %579 = vmatprep.subr.mxu0 0.0
        %580 = vmatpush2.msra.mxu0 0.0
        %581 = vmatprep.subr.mxu0 0.0
        %582 = vmatpush2.msra.mxu0 0.0
        %583 = vmatprep.subr.mxu0 0.0
        %584 = vmatpush2.msra.mxu0 0.0
        %585 = vmatprep.subr.mxu0 0.0
        %586 = vmatpush2.msra.mxu0 0.0
        %587 = vmatprep.subr.mxu0 0.0
        %588 = vmatpush2.msra.mxu0 0.0
        %589 = vmatprep.subr.mxu0 0.0
        %590 = vmatpush2.msra.mxu0 0.0
        %591 = vmatprep.subr.mxu0 0.0
        %592 = vmatpush2.msra.mxu0 0.0
        %593 = vmatprep.subr.mxu0 0.0
        %594 = vmatpush2.msra.mxu0 0.0
        %595 = vmatprep.subr.mxu0 0.0
        %596 = vmatpush2.msra.mxu0 0.0
        %597 = vmatprep.subr.mxu0 0.0
        %598 = vmatpush2.msra.mxu0 0.0
        %599 = vmatprep.subr.mxu0 0.0
        %600 = vmatpush2.msra.mxu0 0.0
        %601 = vmatprep.subr.mxu0 0.0
        %602 = vmatpush2.msra.mxu0 0.0
        %603 = vmatprep.subr.mxu0 0.0
        %604 = vmatpush2.msra.mxu0 0.0
        %605 = vmatprep.mubr.f32.mxu0 0.0
        %606 = vmatmul.mubr.f32.gmra.mxu0 %v179
        %v607 = vpop.f32.mrf.mxu0
        %v608 = vadd.f32 0.0, %v607
        %v609 = vpop.f32.mrf.mxu0
        %v610 = vadd.f32 0.0, %v609
        %611 = vmatprep.mubr.f32.mxu0 0.0
        %612 = vmatmul.mubr.f32.gmra.mxu0 %v180
        %v613 = vpop.f32.mrf.mxu0
        %v614 = vadd.f32 0.0, %v613
        %v615 = vpop.f32.mrf.mxu0
        %v616 = vadd.f32 0.0, %v615
        %617 = vmatprep.mubr.f32.mxu0 0.0
        %618 = vmatmul.mubr.f32.gmra.mxu0 %v181
        %v619 = vpop.f32.mrf.mxu0
        %v620 = vadd.f32 0.0, %v619
        %v621 = vpop.f32.mrf.mxu0
        %v622 = vadd.f32 0.0, %v621
        %623 = vmatprep.mubr.f32.mxu0 0.0
        %624 = vmatmul.mubr.f32.gmra.mxu0 %v182
        %v625 = vpop.f32.mrf.mxu0
        %v626 = vadd.f32 0.0, %v625
        %v627 = vpop.f32.mrf.mxu0
        %v628 = vadd.f32 0.0, %v627
        %629 = vmatprep.mubr.f32.mxu0 0.0
        %630 = vmatmul.mubr.f32.gmra.mxu0 %v183
        %v631 = vpop.f32.mrf.mxu0
        %v632 = vadd.f32 0.0, %v631
        %v633 = vpop.f32.mrf.mxu0
        %v634 = vadd.f32 0.0, %v633
        %635 = vmatprep.mubr.f32.mxu0 0.0
        %636 = vmatmul.mubr.f32.gmra.mxu0 %v184
        %v637 = vpop.f32.mrf.mxu0
        %v638 = vadd.f32 0.0, %v637
        %v639 = vpop.f32.mrf.mxu0
        %v640 = vadd.f32 0.0, %v639
        %641 = vmatprep.mubr.f32.mxu0 0.0
        %642 = vmatmul.mubr.f32.gmra.mxu0 %v185
        %v643 = vpop.f32.mrf.mxu0
        %v644 = vadd.f32 0.0, %v643
        %v645 = vpop.f32.mrf.mxu0
        %v646 = vadd.f32 0.0, %v645
        %647 = vmatprep.mubr.f32.mxu0 0.0
        %648 = vmatmul.mubr.f32.gmra.mxu0 %v186
        %v649 = vpop.f32.mrf.mxu0
        %v650 = vadd.f32 0.0, %v649
        %v651 = vpop.f32.mrf.mxu0
        %v652 = vadd.f32 0.0, %v651
        %653 = vdwg.mxu0
        %654 = vmatprep.subr.mxu0 %v540
        %655 = vmatpush1.msra.mxu0 %v539
        %656 = vmatprep.subr.mxu0 %v536
        %657 = vmatpush1.msra.mxu0 %v535
        %658 = vmatprep.subr.mxu0 %v532
        %659 = vmatpush1.msra.mxu0 %v531
        %660 = vmatprep.subr.mxu0 %v528
        %661 = vmatpush1.msra.mxu0 %v527
        %662 = vmatprep.subr.mxu0 %v524
        %663 = vmatpush1.msra.mxu0 %v523
        %664 = vmatprep.subr.mxu0 %v520
        %665 = vmatpush1.msra.mxu0 %v519
        %666 = vmatprep.subr.mxu0 %v516
        %667 = vmatpush1.msra.mxu0 %v515
        %668 = vmatprep.subr.mxu0 %v512
        %669 = vmatpush1.msra.mxu0 %v511
        %670 = vmatprep.subr.mxu0 %v508
        %671 = vmatpush1.msra.mxu0 %v507
        %672 = vmatprep.subr.mxu0 %v504
        %673 = vmatpush1.msra.mxu0 %v503
        %674 = vmatprep.subr.mxu0 %v500
        %675 = vmatpush1.msra.mxu0 %v499
        %676 = vmatprep.subr.mxu0 %v496
        %677 = vmatpush1.msra.mxu0 %v495
        %678 = vmatprep.subr.mxu0 %v492
        %679 = vmatpush1.msra.mxu0 %v491
        %680 = vmatprep.subr.mxu0 %v488
        %681 = vmatpush1.msra.mxu0 %v487
        %682 = vmatprep.subr.mxu0 %v484
        %683 = vmatpush1.msra.mxu0 %v483
        %684 = vmatprep.subr.mxu0 %v480
        %685 = vmatpush1.msra.mxu0 %v479
        %686 = vmatprep.subr.mxu0 0.0
        %687 = vmatpush2.msra.mxu0 0.0
        %688 = vmatprep.subr.mxu0 0.0
        %689 = vmatpush2.msra.mxu0 0.0
        %690 = vmatprep.subr.mxu0 0.0
        %691 = vmatpush2.msra.mxu0 0.0
        %692 = vmatprep.subr.mxu0 0.0
        %693 = vmatpush2.msra.mxu0 0.0
        %694 = vmatprep.subr.mxu0 0.0
        %695 = vmatpush2.msra.mxu0 0.0
        %696 = vmatprep.subr.mxu0 0.0
        %697 = vmatpush2.msra.mxu0 0.0
        %698 = vmatprep.subr.mxu0 0.0
        %699 = vmatpush2.msra.mxu0 0.0
        %700 = vmatprep.subr.mxu0 0.0
        %701 = vmatpush2.msra.mxu0 0.0
        %702 = vmatprep.subr.mxu0 0.0
        %703 = vmatpush2.msra.mxu0 0.0
        %704 = vmatprep.subr.mxu0 0.0
        %705 = vmatpush2.msra.mxu0 0.0
        %706 = vmatprep.subr.mxu0 0.0
        %707 = vmatpush2.msra.mxu0 0.0
        %708 = vmatprep.subr.mxu0 0.0
        %709 = vmatpush2.msra.mxu0 0.0
        %710 = vmatprep.subr.mxu0 0.0
        %711 = vmatpush2.msra.mxu0 0.0
        %712 = vmatprep.subr.mxu0 0.0
        %713 = vmatpush2.msra.mxu0 0.0
        %714 = vmatprep.subr.mxu0 0.0
        %715 = vmatpush2.msra.mxu0 0.0
        %716 = vmatprep.subr.mxu0 0.0
        %717 = vmatpush2.msra.mxu0 0.0
        %718 = vmatprep.mubr.f32.mxu0 0.0
        %719 = vmatmul.mubr.f32.gmra.mxu0 %v179
        %v720 = vpop.f32.mrf.mxu0
        %v721 = vadd.f32 0.0, %v720
        %v722 = vpop.f32.mrf.mxu0
        %v723 = vadd.f32 0.0, %v722
        %724 = vmatprep.mubr.f32.mxu0 0.0
        %725 = vmatmul.mubr.f32.gmra.mxu0 %v180
        %v726 = vpop.f32.mrf.mxu0
        %v727 = vadd.f32 0.0, %v726
        %v728 = vpop.f32.mrf.mxu0
        %v729 = vadd.f32 0.0, %v728
        %730 = vmatprep.mubr.f32.mxu0 0.0
        %731 = vmatmul.mubr.f32.gmra.mxu0 %v181
        %v732 = vpop.f32.mrf.mxu0
        %v733 = vadd.f32 0.0, %v732
        %v734 = vpop.f32.mrf.mxu0
        %v735 = vadd.f32 0.0, %v734
        %736 = vmatprep.mubr.f32.mxu0 0.0
        %737 = vmatmul.mubr.f32.gmra.mxu0 %v182
        %v738 = vpop.f32.mrf.mxu0
        %v739 = vadd.f32 0.0, %v738
        %v740 = vpop.f32.mrf.mxu0
        %v741 = vadd.f32 0.0, %v740
        %742 = vmatprep.mubr.f32.mxu0 0.0
        %743 = vmatmul.mubr.f32.gmra.mxu0 %v183
        %v744 = vpop.f32.mrf.mxu0
        %v745 = vadd.f32 0.0, %v744
        %v746 = vpop.f32.mrf.mxu0
        %v747 = vadd.f32 0.0, %v746
        %748 = vmatprep.mubr.f32.mxu0 0.0
        %749 = vmatmul.mubr.f32.gmra.mxu0 %v184
        %v750 = vpop.f32.mrf.mxu0
        %v751 = vadd.f32 0.0, %v750
        %v752 = vpop.f32.mrf.mxu0
        %v753 = vadd.f32 0.0, %v752
        %754 = vmatprep.mubr.f32.mxu0 0.0
        %755 = vmatmul.mubr.f32.gmra.mxu0 %v185
        %v756 = vpop.f32.mrf.mxu0
        %v757 = vadd.f32 0.0, %v756
        %v758 = vpop.f32.mrf.mxu0
        %v759 = vadd.f32 0.0, %v758
        %760 = vmatprep.mubr.f32.mxu0 0.0
        %761 = vmatmul.mubr.f32.gmra.mxu0 %v186
        %v762 = vpop.f32.mrf.mxu0
        %v763 = vadd.f32 0.0, %v762
        %v764 = vpop.f32.mrf.mxu0
        %v765 = vadd.f32 0.0, %v764
        %766 = vdwg.mxu0
        %v767 = vmax.f32 %v318, %v608
        %v768 = vmax.f32 %v320, %v610
        %v769 = vmax.f32 %v431, %v721
        %v770 = vmax.f32 %v433, %v723
        %v771 = vmax.f32 %v324, %v614
        %v772 = vmax.f32 %v326, %v616
        %v773 = vmax.f32 %v437, %v727
        %v774 = vmax.f32 %v439, %v729
        %v775 = vmax.f32 %v330, %v620
        %v776 = vmax.f32 %v332, %v622
        %v777 = vmax.f32 %v443, %v733
        %v778 = vmax.f32 %v445, %v735
        %v779 = vmax.f32 %v336, %v626
        %v780 = vmax.f32 %v338, %v628
        %v781 = vmax.f32 %v449, %v739
        %v782 = vmax.f32 %v451, %v741
        %v783 = vmax.f32 %v342, %v632
        %v784 = vmax.f32 %v344, %v634
        %v785 = vmax.f32 %v455, %v745
        %v786 = vmax.f32 %v457, %v747
        %v787 = vmax.f32 %v348, %v638
        %v788 = vmax.f32 %v350, %v640
        %v789 = vmax.f32 %v461, %v751
        %v790 = vmax.f32 %v463, %v753
        %v791 = vmax.f32 %v354, %v644
        %v792 = vmax.f32 %v356, %v646
        %v793 = vmax.f32 %v467, %v757
        %v794 = vmax.f32 %v469, %v759
        %v795 = vmax.f32 %v360, %v650
        %v796 = vmax.f32 %v362, %v652
        %v797 = vmax.f32 %v473, %v763
        %v798 = vmax.f32 %v475, %v765
        %v799 = vld [vmem:[#allocation5 + $0x40] sm:$0xff]
        %v800 = vld [vmem:[#allocation5 + $0x48] sm:$0xff]
        %v801 = vld [vmem:[#allocation5 + $0x50] sm:$0xff]
        %v802 = vld [vmem:[#allocation5 + $0x58] sm:$0xff]
        %v803 = vld [vmem:[#allocation5 + $0xc0] sm:$0xff]
        %v804 = vld [vmem:[#allocation5 + $0xc8] sm:$0xff]
        %v805 = vld [vmem:[#allocation5 + $0xd0] sm:$0xff]
        %v806 = vld [vmem:[#allocation5 + $0xd8] sm:$0xff]
        %v807 = vld [vmem:[#allocation5 + $0x140] sm:$0xff]
        %v808 = vld [vmem:[#allocation5 + $0x148] sm:$0xff]
        %v809 = vld [vmem:[#allocation5 + $0x150] sm:$0xff]
        %v810 = vld [vmem:[#allocation5 + $0x158] sm:$0xff]
        %v811 = vld [vmem:[#allocation5 + $0x1c0] sm:$0xff]
        %v812 = vld [vmem:[#allocation5 + $0x1c8] sm:$0xff]
        %v813 = vld [vmem:[#allocation5 + $0x1d0] sm:$0xff]
        %v814 = vld [vmem:[#allocation5 + $0x1d8] sm:$0xff]
        %v815 = vld [vmem:[#allocation5 + $0x240] sm:$0xff]
        %v816 = vld [vmem:[#allocation5 + $0x248] sm:$0xff]
        %v817 = vld [vmem:[#allocation5 + $0x250] sm:$0xff]
        %v818 = vld [vmem:[#allocation5 + $0x258] sm:$0xff]
        %v819 = vld [vmem:[#allocation5 + $0x2c0] sm:$0xff]
        %v820 = vld [vmem:[#allocation5 + $0x2c8] sm:$0xff]
        %v821 = vld [vmem:[#allocation5 + $0x2d0] sm:$0xff]
        %v822 = vld [vmem:[#allocation5 + $0x2d8] sm:$0xff]
        %v823 = vld [vmem:[#allocation5 + $0x340] sm:$0xff]
        %v824 = vld [vmem:[#allocation5 + $0x348] sm:$0xff]
        %v825 = vld [vmem:[#allocation5 + $0x350] sm:$0xff]
        %v826 = vld [vmem:[#allocation5 + $0x358] sm:$0xff]
        %v827 = vld [vmem:[#allocation5 + $0x3c0] sm:$0xff]
        %v828 = vld [vmem:[#allocation5 + $0x3c8] sm:$0xff]
        %v829 = vld [vmem:[#allocation5 + $0x3d0] sm:$0xff]
        %v830 = vld [vmem:[#allocation5 + $0x3d8] sm:$0xff]
        %v831 = vld [vmem:[#allocation5 + $0x440] sm:$0xff]
        %v832 = vld [vmem:[#allocation5 + $0x448] sm:$0xff]
        %v833 = vld [vmem:[#allocation5 + $0x450] sm:$0xff]
        %v834 = vld [vmem:[#allocation5 + $0x458] sm:$0xff]
        %v835 = vld [vmem:[#allocation5 + $0x4c0] sm:$0xff]
        %v836 = vld [vmem:[#allocation5 + $0x4c8] sm:$0xff]
        %v837 = vld [vmem:[#allocation5 + $0x4d0] sm:$0xff]
        %v838 = vld [vmem:[#allocation5 + $0x4d8] sm:$0xff]
        %v839 = vld [vmem:[#allocation5 + $0x540] sm:$0xff]
        %v840 = vld [vmem:[#allocation5 + $0x548] sm:$0xff]
        %v841 = vld [vmem:[#allocation5 + $0x550] sm:$0xff]
        %v842 = vld [vmem:[#allocation5 + $0x558] sm:$0xff]
        %v843 = vld [vmem:[#allocation5 + $0x5c0] sm:$0xff]
        %v844 = vld [vmem:[#allocation5 + $0x5c8] sm:$0xff]
        %v845 = vld [vmem:[#allocation5 + $0x5d0] sm:$0xff]
        %v846 = vld [vmem:[#allocation5 + $0x5d8] sm:$0xff]
        %v847 = vld [vmem:[#allocation5 + $0x640] sm:$0xff]
        %v848 = vld [vmem:[#allocation5 + $0x648] sm:$0xff]
        %v849 = vld [vmem:[#allocation5 + $0x650] sm:$0xff]
        %v850 = vld [vmem:[#allocation5 + $0x658] sm:$0xff]
        %v851 = vld [vmem:[#allocation5 + $0x6c0] sm:$0xff]
        %v852 = vld [vmem:[#allocation5 + $0x6c8] sm:$0xff]
        %v853 = vld [vmem:[#allocation5 + $0x6d0] sm:$0xff]
        %v854 = vld [vmem:[#allocation5 + $0x6d8] sm:$0xff]
        %v855 = vld [vmem:[#allocation5 + $0x740] sm:$0xff]
        %v856 = vld [vmem:[#allocation5 + $0x748] sm:$0xff]
        %v857 = vld [vmem:[#allocation5 + $0x750] sm:$0xff]
        %v858 = vld [vmem:[#allocation5 + $0x758] sm:$0xff]
        %v859 = vld [vmem:[#allocation5 + $0x7c0] sm:$0xff]
        %v860 = vld [vmem:[#allocation5 + $0x7c8] sm:$0xff]
        %v861 = vld [vmem:[#allocation5 + $0x7d0] sm:$0xff]
        %v862 = vld [vmem:[#allocation5 + $0x7d8] sm:$0xff]
        %863 = vmatprep.subr.mxu0 %v860
        %864 = vmatpush1.msra.mxu0 %v859
        %865 = vmatprep.subr.mxu0 %v856
        %866 = vmatpush1.msra.mxu0 %v855
        %867 = vmatprep.subr.mxu0 %v852
        %868 = vmatpush1.msra.mxu0 %v851
        %869 = vmatprep.subr.mxu0 %v848
        %870 = vmatpush1.msra.mxu0 %v847
        %871 = vmatprep.subr.mxu0 %v844
        %872 = vmatpush1.msra.mxu0 %v843
        %873 = vmatprep.subr.mxu0 %v840
        %874 = vmatpush1.msra.mxu0 %v839
        %875 = vmatprep.subr.mxu0 %v836
        %876 = vmatpush1.msra.mxu0 %v835
        %877 = vmatprep.subr.mxu0 %v832
        %878 = vmatpush1.msra.mxu0 %v831
        %879 = vmatprep.subr.mxu0 %v828
        %880 = vmatpush1.msra.mxu0 %v827
        %881 = vmatprep.subr.mxu0 %v824
        %882 = vmatpush1.msra.mxu0 %v823
        %883 = vmatprep.subr.mxu0 %v820
        %884 = vmatpush1.msra.mxu0 %v819
        %885 = vmatprep.subr.mxu0 %v816
        %886 = vmatpush1.msra.mxu0 %v815
        %887 = vmatprep.subr.mxu0 %v812
        %888 = vmatpush1.msra.mxu0 %v811
        %889 = vmatprep.subr.mxu0 %v808
        %890 = vmatpush1.msra.mxu0 %v807
        %891 = vmatprep.subr.mxu0 %v804
        %892 = vmatpush1.msra.mxu0 %v803
        %893 = vmatprep.subr.mxu0 %v800
        %894 = vmatpush1.msra.mxu0 %v799
        %895 = vmatprep.subr.mxu0 0.0
        %896 = vmatpush2.msra.mxu0 0.0
        %897 = vmatprep.subr.mxu0 0.0
        %898 = vmatpush2.msra.mxu0 0.0
        %899 = vmatprep.subr.mxu0 0.0
        %900 = vmatpush2.msra.mxu0 0.0
        %901 = vmatprep.subr.mxu0 0.0
        %902 = vmatpush2.msra.mxu0 0.0
        %903 = vmatprep.subr.mxu0 0.0
        %904 = vmatpush2.msra.mxu0 0.0
        %905 = vmatprep.subr.mxu0 0.0
        %906 = vmatpush2.msra.mxu0 0.0
        %907 = vmatprep.subr.mxu0 0.0
        %908 = vmatpush2.msra.mxu0 0.0
        %909 = vmatprep.subr.mxu0 0.0
        %910 = vmatpush2.msra.mxu0 0.0
        %911 = vmatprep.subr.mxu0 0.0
        %912 = vmatpush2.msra.mxu0 0.0
        %913 = vmatprep.subr.mxu0 0.0
        %914 = vmatpush2.msra.mxu0 0.0
        %915 = vmatprep.subr.mxu0 0.0
        %916 = vmatpush2.msra.mxu0 0.0
        %917 = vmatprep.subr.mxu0 0.0
        %918 = vmatpush2.msra.mxu0 0.0
        %919 = vmatprep.subr.mxu0 0.0
        %920 = vmatpush2.msra.mxu0 0.0
        %921 = vmatprep.subr.mxu0 0.0
        %922 = vmatpush2.msra.mxu0 0.0
        %923 = vmatprep.subr.mxu0 0.0
        %924 = vmatpush2.msra.mxu0 0.0
        %925 = vmatprep.subr.mxu0 0.0
        %926 = vmatpush2.msra.mxu0 0.0
        %927 = vmatprep.mubr.f32.mxu0 0.0
        %928 = vmatmul.mubr.f32.gmra.mxu0 %v179
        %v929 = vpop.f32.mrf.mxu0
        %v930 = vadd.f32 0.0, %v929
        %v931 = vpop.f32.mrf.mxu0
        %v932 = vadd.f32 0.0, %v931
        %933 = vmatprep.mubr.f32.mxu0 0.0
        %934 = vmatmul.mubr.f32.gmra.mxu0 %v180
        %v935 = vpop.f32.mrf.mxu0
        %v936 = vadd.f32 0.0, %v935
        %v937 = vpop.f32.mrf.mxu0
        %v938 = vadd.f32 0.0, %v937
        %939 = vmatprep.mubr.f32.mxu0 0.0
        %940 = vmatmul.mubr.f32.gmra.mxu0 %v181
        %v941 = vpop.f32.mrf.mxu0
        %v942 = vadd.f32 0.0, %v941
        %v943 = vpop.f32.mrf.mxu0
        %v944 = vadd.f32 0.0, %v943
        %945 = vmatprep.mubr.f32.mxu0 0.0
        %946 = vmatmul.mubr.f32.gmra.mxu0 %v182
        %v947 = vpop.f32.mrf.mxu0
        %v948 = vadd.f32 0.0, %v947
        %v949 = vpop.f32.mrf.mxu0
        %v950 = vadd.f32 0.0, %v949
        %951 = vmatprep.mubr.f32.mxu0 0.0
        %952 = vmatmul.mubr.f32.gmra.mxu0 %v183
        %v953 = vpop.f32.mrf.mxu0
        %v954 = vadd.f32 0.0, %v953
        %v955 = vpop.f32.mrf.mxu0
        %v956 = vadd.f32 0.0, %v955
        %957 = vmatprep.mubr.f32.mxu0 0.0
        %958 = vmatmul.mubr.f32.gmra.mxu0 %v184
        %v959 = vpop.f32.mrf.mxu0
        %v960 = vadd.f32 0.0, %v959
        %v961 = vpop.f32.mrf.mxu0
        %v962 = vadd.f32 0.0, %v961
        %963 = vmatprep.mubr.f32.mxu0 0.0
        %964 = vmatmul.mubr.f32.gmra.mxu0 %v185
        %v965 = vpop.f32.mrf.mxu0
        %v966 = vadd.f32 0.0, %v965
        %v967 = vpop.f32.mrf.mxu0
        %v968 = vadd.f32 0.0, %v967
        %969 = vmatprep.mubr.f32.mxu0 0.0
        %970 = vmatmul.mubr.f32.gmra.mxu0 %v186
        %v971 = vpop.f32.mrf.mxu0
        %v972 = vadd.f32 0.0, %v971
        %v973 = vpop.f32.mrf.mxu0
        %v974 = vadd.f32 0.0, %v973
        %975 = vdwg.mxu0
        %976 = vmatprep.subr.mxu0 %v862
        %977 = vmatpush1.msra.mxu0 %v861
        %978 = vmatprep.subr.mxu0 %v858
        %979 = vmatpush1.msra.mxu0 %v857
        %980 = vmatprep.subr.mxu0 %v854
        %981 = vmatpush1.msra.mxu0 %v853
        %982 = vmatprep.subr.mxu0 %v850
        %983 = vmatpush1.msra.mxu0 %v849
        %984 = vmatprep.subr.mxu0 %v846
        %985 = vmatpush1.msra.mxu0 %v845
        %986 = vmatprep.subr.mxu0 %v842
        %987 = vmatpush1.msra.mxu0 %v841
        %988 = vmatprep.subr.mxu0 %v838
        %989 = vmatpush1.msra.mxu0 %v837
        %990 = vmatprep.subr.mxu0 %v834
        %991 = vmatpush1.msra.mxu0 %v833
        %992 = vmatprep.subr.mxu0 %v830
        %993 = vmatpush1.msra.mxu0 %v829
        %994 = vmatprep.subr.mxu0 %v826
        %995 = vmatpush1.msra.mxu0 %v825
        %996 = vmatprep.subr.mxu0 %v822
        %997 = vmatpush1.msra.mxu0 %v821
        %998 = vmatprep.subr.mxu0 %v818
        %999 = vmatpush1.msra.mxu0 %v817
        %1000 = vmatprep.subr.mxu0 %v814
        %1001 = vmatpush1.msra.mxu0 %v813
        %1002 = vmatprep.subr.mxu0 %v810
        %1003 = vmatpush1.msra.mxu0 %v809
        %1004 = vmatprep.subr.mxu0 %v806
        %1005 = vmatpush1.msra.mxu0 %v805
        %1006 = vmatprep.subr.mxu0 %v802
        %1007 = vmatpush1.msra.mxu0 %v801
        %1008 = vmatprep.subr.mxu0 0.0
        %1009 = vmatpush2.msra.mxu0 0.0
        %1010 = vmatprep.subr.mxu0 0.0
        %1011 = vmatpush2.msra.mxu0 0.0
        %1012 = vmatprep.subr.mxu0 0.0
        %1013 = vmatpush2.msra.mxu0 0.0
        %1014 = vmatprep.subr.mxu0 0.0
        %1015 = vmatpush2.msra.mxu0 0.0
        %1016 = vmatprep.subr.mxu0 0.0
        %1017 = vmatpush2.msra.mxu0 0.0
        %1018 = vmatprep.subr.mxu0 0.0
        %1019 = vmatpush2.msra.mxu0 0.0
        %1020 = vmatprep.subr.mxu0 0.0
        %1021 = vmatpush2.msra.mxu0 0.0
        %1022 = vmatprep.subr.mxu0 0.0
        %1023 = vmatpush2.msra.mxu0 0.0
        %1024 = vmatprep.subr.mxu0 0.0
        %1025 = vmatpush2.msra.mxu0 0.0
        %1026 = vmatprep.subr.mxu0 0.0
        %1027 = vmatpush2.msra.mxu0 0.0
        %1028 = vmatprep.subr.mxu0 0.0
        %1029 = vmatpush2.msra.mxu0 0.0
        %1030 = vmatprep.subr.mxu0 0.0
        %1031 = vmatpush2.msra.mxu0 0.0
        %1032 = vmatprep.subr.mxu0 0.0
        %1033 = vmatpush2.msra.mxu0 0.0
        %1034 = vmatprep.subr.mxu0 0.0
        %1035 = vmatpush2.msra.mxu0 0.0
        %1036 = vmatprep.subr.mxu0 0.0
        %1037 = vmatpush2.msra.mxu0 0.0
        %1038 = vmatprep.subr.mxu0 0.0
        %1039 = vmatpush2.msra.mxu0 0.0
        %1040 = vmatprep.mubr.f32.mxu0 0.0
        %1041 = vmatmul.mubr.f32.gmra.mxu0 %v179
        %v1042 = vpop.f32.mrf.mxu0
        %v1043 = vadd.f32 0.0, %v1042
        %v1044 = vpop.f32.mrf.mxu0
        %v1045 = vadd.f32 0.0, %v1044
        %1046 = vmatprep.mubr.f32.mxu0 0.0
        %1047 = vmatmul.mubr.f32.gmra.mxu0 %v180
        %v1048 = vpop.f32.mrf.mxu0
        %v1049 = vadd.f32 0.0, %v1048
        %v1050 = vpop.f32.mrf.mxu0
        %v1051 = vadd.f32 0.0, %v1050
        %1052 = vmatprep.mubr.f32.mxu0 0.0
        %1053 = vmatmul.mubr.f32.gmra.mxu0 %v181
        %v1054 = vpop.f32.mrf.mxu0
        %v1055 = vadd.f32 0.0, %v1054
        %v1056 = vpop.f32.mrf.mxu0
        %v1057 = vadd.f32 0.0, %v1056
        %1058 = vmatprep.mubr.f32.mxu0 0.0
        %1059 = vmatmul.mubr.f32.gmra.mxu0 %v182
        %v1060 = vpop.f32.mrf.mxu0
        %v1061 = vadd.f32 0.0, %v1060
        %v1062 = vpop.f32.mrf.mxu0
        %v1063 = vadd.f32 0.0, %v1062
        %1064 = vmatprep.mubr.f32.mxu0 0.0
        %1065 = vmatmul.mubr.f32.gmra.mxu0 %v183
        %v1066 = vpop.f32.mrf.mxu0
        %v1067 = vadd.f32 0.0, %v1066
        %v1068 = vpop.f32.mrf.mxu0
        %v1069 = vadd.f32 0.0, %v1068
        %1070 = vmatprep.mubr.f32.mxu0 0.0
        %1071 = vmatmul.mubr.f32.gmra.mxu0 %v184
        %v1072 = vpop.f32.mrf.mxu0
        %v1073 = vadd.f32 0.0, %v1072
        %v1074 = vpop.f32.mrf.mxu0
        %v1075 = vadd.f32 0.0, %v1074
        %1076 = vmatprep.mubr.f32.mxu0 0.0
        %1077 = vmatmul.mubr.f32.gmra.mxu0 %v185
        %v1078 = vpop.f32.mrf.mxu0
        %v1079 = vadd.f32 0.0, %v1078
        %v1080 = vpop.f32.mrf.mxu0
        %v1081 = vadd.f32 0.0, %v1080
        %1082 = vmatprep.mubr.f32.mxu0 0.0
        %1083 = vmatmul.mubr.f32.gmra.mxu0 %v186
        %v1084 = vpop.f32.mrf.mxu0
        %v1085 = vadd.f32 0.0, %v1084
        %v1086 = vpop.f32.mrf.mxu0
        %v1087 = vadd.f32 0.0, %v1086
        %1088 = vdwg.mxu0
        %v1089 = vmax.f32 %v767, %v930
        %v1090 = vmax.f32 %v768, %v932
        %v1091 = vmax.f32 %v769, %v1043
        %v1092 = vmax.f32 %v770, %v1045
        %v1093 = vmax.f32 %v771, %v936
        %v1094 = vmax.f32 %v772, %v938
        %v1095 = vmax.f32 %v773, %v1049
        %v1096 = vmax.f32 %v774, %v1051
        %v1097 = vmax.f32 %v775, %v942
        %v1098 = vmax.f32 %v776, %v944
        %v1099 = vmax.f32 %v777, %v1055
        %v1100 = vmax.f32 %v778, %v1057
        %v1101 = vmax.f32 %v779, %v948
        %v1102 = vmax.f32 %v780, %v950
        %v1103 = vmax.f32 %v781, %v1061
        %v1104 = vmax.f32 %v782, %v1063
        %v1105 = vmax.f32 %v783, %v954
        %v1106 = vmax.f32 %v784, %v956
        %v1107 = vmax.f32 %v785, %v1067
        %v1108 = vmax.f32 %v786, %v1069
        %v1109 = vmax.f32 %v787, %v960
        %v1110 = vmax.f32 %v788, %v962
        %v1111 = vmax.f32 %v789, %v1073
        %v1112 = vmax.f32 %v790, %v1075
        %v1113 = vmax.f32 %v791, %v966
        %v1114 = vmax.f32 %v792, %v968
        %v1115 = vmax.f32 %v793, %v1079
        %v1116 = vmax.f32 %v794, %v1081
        %v1117 = vmax.f32 %v795, %v972
        %v1118 = vmax.f32 %v796, %v974
        %v1119 = vmax.f32 %v797, %v1085
        %v1120 = vmax.f32 %v798, %v1087
        %v1121 = vld [vmem:[#allocation5 + $0x60] sm:$0xff]
        %v1122 = vld [vmem:[#allocation5 + $0x68] sm:$0xff]
        %v1123 = vld [vmem:[#allocation5 + $0x70] sm:$0xff]
        %v1124 = vld [vmem:[#allocation5 + $0x78] sm:$0xff]
        %v1125 = vld [vmem:[#allocation5 + $0xe0] sm:$0xff]
        %v1126 = vld [vmem:[#allocation5 + $0xe8] sm:$0xff]
        %v1127 = vld [vmem:[#allocation5 + $0xf0] sm:$0xff]
        %v1128 = vld [vmem:[#allocation5 + $0xf8] sm:$0xff]
        %v1129 = vld [vmem:[#allocation5 + $0x160] sm:$0xff]
        %v1130 = vld [vmem:[#allocation5 + $0x168] sm:$0xff]
        %v1131 = vld [vmem:[#allocation5 + $0x170] sm:$0xff]
        %v1132 = vld [vmem:[#allocation5 + $0x178] sm:$0xff]
        %v1133 = vld [vmem:[#allocation5 + $0x1e0] sm:$0xff]
        %v1134 = vld [vmem:[#allocation5 + $0x1e8] sm:$0xff]
        %v1135 = vld [vmem:[#allocation5 + $0x1f0] sm:$0xff]
        %v1136 = vld [vmem:[#allocation5 + $0x1f8] sm:$0xff]
        %v1137 = vld [vmem:[#allocation5 + $0x260] sm:$0xff]
        %v1138 = vld [vmem:[#allocation5 + $0x268] sm:$0xff]
        %v1139 = vld [vmem:[#allocation5 + $0x270] sm:$0xff]
        %v1140 = vld [vmem:[#allocation5 + $0x278] sm:$0xff]
        %v1141 = vld [vmem:[#allocation5 + $0x2e0] sm:$0xff]
        %v1142 = vld [vmem:[#allocation5 + $0x2e8] sm:$0xff]
        %v1143 = vld [vmem:[#allocation5 + $0x2f0] sm:$0xff]
        %v1144 = vld [vmem:[#allocation5 + $0x2f8] sm:$0xff]
        %v1145 = vld [vmem:[#allocation5 + $0x360] sm:$0xff]
        %v1146 = vld [vmem:[#allocation5 + $0x368] sm:$0xff]
        %v1147 = vld [vmem:[#allocation5 + $0x370] sm:$0xff]
        %v1148 = vld [vmem:[#allocation5 + $0x378] sm:$0xff]
        %v1149 = vld [vmem:[#allocation5 + $0x3e0] sm:$0xff]
        %v1150 = vld [vmem:[#allocation5 + $0x3e8] sm:$0xff]
        %v1151 = vld [vmem:[#allocation5 + $0x3f0] sm:$0xff]
        %v1152 = vld [vmem:[#allocation5 + $0x3f8] sm:$0xff]
        %v1153 = vld [vmem:[#allocation5 + $0x460] sm:$0xff]
        %v1154 = vld [vmem:[#allocation5 + $0x468] sm:$0xff]
        %v1155 = vld [vmem:[#allocation5 + $0x470] sm:$0xff]
        %v1156 = vld [vmem:[#allocation5 + $0x478] sm:$0xff]
        %v1157 = vld [vmem:[#allocation5 + $0x4e0] sm:$0xff]
        %v1158 = vld [vmem:[#allocation5 + $0x4e8] sm:$0xff]
        %v1159 = vld [vmem:[#allocation5 + $0x4f0] sm:$0xff]
        %v1160 = vld [vmem:[#allocation5 + $0x4f8] sm:$0xff]
        %v1161 = vld [vmem:[#allocation5 + $0x560] sm:$0xff]
        %v1162 = vld [vmem:[#allocation5 + $0x568] sm:$0xff]
        %v1163 = vld [vmem:[#allocation5 + $0x570] sm:$0xff]
        %v1164 = vld [vmem:[#allocation5 + $0x578] sm:$0xff]
        %v1165 = vld [vmem:[#allocation5 + $0x5e0] sm:$0xff]
        %v1166 = vld [vmem:[#allocation5 + $0x5e8] sm:$0xff]
        %v1167 = vld [vmem:[#allocation5 + $0x5f0] sm:$0xff]
        %v1168 = vld [vmem:[#allocation5 + $0x5f8] sm:$0xff]
        %v1169 = vld [vmem:[#allocation5 + $0x660] sm:$0xff]
        %v1170 = vld [vmem:[#allocation5 + $0x668] sm:$0xff]
        %v1171 = vld [vmem:[#allocation5 + $0x670] sm:$0xff]
        %v1172 = vld [vmem:[#allocation5 + $0x678] sm:$0xff]
        %v1173 = vld [vmem:[#allocation5 + $0x6e0] sm:$0xff]
        %v1174 = vld [vmem:[#allocation5 + $0x6e8] sm:$0xff]
        %v1175 = vld [vmem:[#allocation5 + $0x6f0] sm:$0xff]
        %v1176 = vld [vmem:[#allocation5 + $0x6f8] sm:$0xff]
        %v1177 = vld [vmem:[#allocation5 + $0x760] sm:$0xff]
        %v1178 = vld [vmem:[#allocation5 + $0x768] sm:$0xff]
        %v1179 = vld [vmem:[#allocation5 + $0x770] sm:$0xff]
        %v1180 = vld [vmem:[#allocation5 + $0x778] sm:$0xff]
        %v1181 = vld [vmem:[#allocation5 + $0x7e0] sm:$0xff]
        %v1182 = vld [vmem:[#allocation5 + $0x7e8] sm:$0xff]
        %v1183 = vld [vmem:[#allocation5 + $0x7f0] sm:$0xff]
        %v1184 = vld [vmem:[#allocation5 + $0x7f8] sm:$0xff]
        %1185 = vmatprep.subr.mxu0 %v1182
        %1186 = vmatpush1.msra.mxu0 %v1181
        %1187 = vmatprep.subr.mxu0 %v1178
        %1188 = vmatpush1.msra.mxu0 %v1177
        %1189 = vmatprep.subr.mxu0 %v1174
        %1190 = vmatpush1.msra.mxu0 %v1173
        %1191 = vmatprep.subr.mxu0 %v1170
        %1192 = vmatpush1.msra.mxu0 %v1169
        %1193 = vmatprep.subr.mxu0 %v1166
        %1194 = vmatpush1.msra.mxu0 %v1165
        %1195 = vmatprep.subr.mxu0 %v1162
        %1196 = vmatpush1.msra.mxu0 %v1161
        %1197 = vmatprep.subr.mxu0 %v1158
        %1198 = vmatpush1.msra.mxu0 %v1157
        %1199 = vmatprep.subr.mxu0 %v1154
        %1200 = vmatpush1.msra.mxu0 %v1153
        %1201 = vmatprep.subr.mxu0 %v1150
        %1202 = vmatpush1.msra.mxu0 %v1149
        %1203 = vmatprep.subr.mxu0 %v1146
        %1204 = vmatpush1.msra.mxu0 %v1145
        %1205 = vmatprep.subr.mxu0 %v1142
        %1206 = vmatpush1.msra.mxu0 %v1141
        %1207 = vmatprep.subr.mxu0 %v1138
        %1208 = vmatpush1.msra.mxu0 %v1137
        %1209 = vmatprep.subr.mxu0 %v1134
        %1210 = vmatpush1.msra.mxu0 %v1133
        %1211 = vmatprep.subr.mxu0 %v1130
        %1212 = vmatpush1.msra.mxu0 %v1129
        %1213 = vmatprep.subr.mxu0 %v1126
        %1214 = vmatpush1.msra.mxu0 %v1125
        %1215 = vmatprep.subr.mxu0 %v1122
        %1216 = vmatpush1.msra.mxu0 %v1121
        %1217 = vmatprep.subr.mxu0 0.0
        %1218 = vmatpush2.msra.mxu0 0.0
        %1219 = vmatprep.subr.mxu0 0.0
        %1220 = vmatpush2.msra.mxu0 0.0
        %1221 = vmatprep.subr.mxu0 0.0
        %1222 = vmatpush2.msra.mxu0 0.0
        %1223 = vmatprep.subr.mxu0 0.0
        %1224 = vmatpush2.msra.mxu0 0.0
        %1225 = vmatprep.subr.mxu0 0.0
        %1226 = vmatpush2.msra.mxu0 0.0
        %1227 = vmatprep.subr.mxu0 0.0
        %1228 = vmatpush2.msra.mxu0 0.0
        %1229 = vmatprep.subr.mxu0 0.0
        %1230 = vmatpush2.msra.mxu0 0.0
        %1231 = vmatprep.subr.mxu0 0.0
        %1232 = vmatpush2.msra.mxu0 0.0
        %1233 = vmatprep.subr.mxu0 0.0
        %1234 = vmatpush2.msra.mxu0 0.0
        %1235 = vmatprep.subr.mxu0 0.0
        %1236 = vmatpush2.msra.mxu0 0.0
        %1237 = vmatprep.subr.mxu0 0.0
        %1238 = vmatpush2.msra.mxu0 0.0
        %1239 = vmatprep.subr.mxu0 0.0
        %1240 = vmatpush2.msra.mxu0 0.0
        %1241 = vmatprep.subr.mxu0 0.0
        %1242 = vmatpush2.msra.mxu0 0.0
        %1243 = vmatprep.subr.mxu0 0.0
        %1244 = vmatpush2.msra.mxu0 0.0
        %1245 = vmatprep.subr.mxu0 0.0
        %1246 = vmatpush2.msra.mxu0 0.0
        %1247 = vmatprep.subr.mxu0 0.0
        %1248 = vmatpush2.msra.mxu0 0.0
        %1249 = vmatprep.mubr.f32.mxu0 0.0
        %1250 = vmatmul.mubr.f32.gmra.mxu0 %v179
        %v1251 = vpop.f32.mrf.mxu0
        %v1252 = vadd.f32 0.0, %v1251
        %v1253 = vpop.f32.mrf.mxu0
        %v1254 = vadd.f32 0.0, %v1253
        %1255 = vmatprep.mubr.f32.mxu0 0.0
        %1256 = vmatmul.mubr.f32.gmra.mxu0 %v180
        %v1257 = vpop.f32.mrf.mxu0
        %v1258 = vadd.f32 0.0, %v1257
        %v1259 = vpop.f32.mrf.mxu0
        %v1260 = vadd.f32 0.0, %v1259
        %1261 = vmatprep.mubr.f32.mxu0 0.0
        %1262 = vmatmul.mubr.f32.gmra.mxu0 %v181
        %v1263 = vpop.f32.mrf.mxu0
        %v1264 = vadd.f32 0.0, %v1263
        %v1265 = vpop.f32.mrf.mxu0
        %v1266 = vadd.f32 0.0, %v1265
        %1267 = vmatprep.mubr.f32.mxu0 0.0
        %1268 = vmatmul.mubr.f32.gmra.mxu0 %v182
        %v1269 = vpop.f32.mrf.mxu0
        %v1270 = vadd.f32 0.0, %v1269
        %v1271 = vpop.f32.mrf.mxu0
        %v1272 = vadd.f32 0.0, %v1271
        %1273 = vmatprep.mubr.f32.mxu0 0.0
        %1274 = vmatmul.mubr.f32.gmra.mxu0 %v183
        %v1275 = vpop.f32.mrf.mxu0
        %v1276 = vadd.f32 0.0, %v1275
        %v1277 = vpop.f32.mrf.mxu0
        %v1278 = vadd.f32 0.0, %v1277
        %1279 = vmatprep.mubr.f32.mxu0 0.0
        %1280 = vmatmul.mubr.f32.gmra.mxu0 %v184
        %v1281 = vpop.f32.mrf.mxu0
        %v1282 = vadd.f32 0.0, %v1281
        %v1283 = vpop.f32.mrf.mxu0
        %v1284 = vadd.f32 0.0, %v1283
        %1285 = vmatprep.mubr.f32.mxu0 0.0
        %1286 = vmatmul.mubr.f32.gmra.mxu0 %v185
        %v1287 = vpop.f32.mrf.mxu0
        %v1288 = vadd.f32 0.0, %v1287
        %v1289 = vpop.f32.mrf.mxu0
        %v1290 = vadd.f32 0.0, %v1289
        %1291 = vmatprep.mubr.f32.mxu0 0.0
        %1292 = vmatmul.mubr.f32.gmra.mxu0 %v186
        %v1293 = vpop.f32.mrf.mxu0
        %v1294 = vadd.f32 0.0, %v1293
        %v1295 = vpop.f32.mrf.mxu0
        %v1296 = vadd.f32 0.0, %v1295
        %1297 = vdwg.mxu0
        %1298 = vmatprep.subr.mxu0 %v1184
        %1299 = vmatpush1.msra.mxu0 %v1183
        %1300 = vmatprep.subr.mxu0 %v1180
        %1301 = vmatpush1.msra.mxu0 %v1179
        %1302 = vmatprep.subr.mxu0 %v1176
        %1303 = vmatpush1.msra.mxu0 %v1175
        %1304 = vmatprep.subr.mxu0 %v1172
        %1305 = vmatpush1.msra.mxu0 %v1171
        %1306 = vmatprep.subr.mxu0 %v1168
        %1307 = vmatpush1.msra.mxu0 %v1167
        %1308 = vmatprep.subr.mxu0 %v1164
        %1309 = vmatpush1.msra.mxu0 %v1163
        %1310 = vmatprep.subr.mxu0 %v1160
        %1311 = vmatpush1.msra.mxu0 %v1159
        %1312 = vmatprep.subr.mxu0 %v1156
        %1313 = vmatpush1.msra.mxu0 %v1155
        %1314 = vmatprep.subr.mxu0 %v1152
        %1315 = vmatpush1.msra.mxu0 %v1151
        %1316 = vmatprep.subr.mxu0 %v1148
        %1317 = vmatpush1.msra.mxu0 %v1147
        %1318 = vmatprep.subr.mxu0 %v1144
        %1319 = vmatpush1.msra.mxu0 %v1143
        %1320 = vmatprep.subr.mxu0 %v1140
        %1321 = vmatpush1.msra.mxu0 %v1139
        %1322 = vmatprep.subr.mxu0 %v1136
        %1323 = vmatpush1.msra.mxu0 %v1135
        %1324 = vmatprep.subr.mxu0 %v1132
        %1325 = vmatpush1.msra.mxu0 %v1131
        %1326 = vmatprep.subr.mxu0 %v1128
        %1327 = vmatpush1.msra.mxu0 %v1127
        %1328 = vmatprep.subr.mxu0 %v1124
        %1329 = vmatpush1.msra.mxu0 %v1123
        %1330 = vmatprep.subr.mxu0 0.0
        %1331 = vmatpush2.msra.mxu0 0.0
        %1332 = vmatprep.subr.mxu0 0.0
        %1333 = vmatpush2.msra.mxu0 0.0
        %1334 = vmatprep.subr.mxu0 0.0
        %1335 = vmatpush2.msra.mxu0 0.0
        %1336 = vmatprep.subr.mxu0 0.0
        %1337 = vmatpush2.msra.mxu0 0.0
        %1338 = vmatprep.subr.mxu0 0.0
        %1339 = vmatpush2.msra.mxu0 0.0
        %1340 = vmatprep.subr.mxu0 0.0
        %1341 = vmatpush2.msra.mxu0 0.0
        %1342 = vmatprep.subr.mxu0 0.0
        %1343 = vmatpush2.msra.mxu0 0.0
        %1344 = vmatprep.subr.mxu0 0.0
        %1345 = vmatpush2.msra.mxu0 0.0
        %1346 = vmatprep.subr.mxu0 0.0
        %1347 = vmatpush2.msra.mxu0 0.0
        %1348 = vmatprep.subr.mxu0 0.0
        %1349 = vmatpush2.msra.mxu0 0.0
        %1350 = vmatprep.subr.mxu0 0.0
        %1351 = vmatpush2.msra.mxu0 0.0
        %1352 = vmatprep.subr.mxu0 0.0
        %1353 = vmatpush2.msra.mxu0 0.0
        %1354 = vmatprep.subr.mxu0 0.0
        %1355 = vmatpush2.msra.mxu0 0.0
        %1356 = vmatprep.subr.mxu0 0.0
        %1357 = vmatpush2.msra.mxu0 0.0
        %1358 = vmatprep.subr.mxu0 0.0
        %1359 = vmatpush2.msra.mxu0 0.0
        %1360 = vmatprep.subr.mxu0 0.0
        %1361 = vmatpush2.msra.mxu0 0.0
        %1362 = vmatprep.mubr.f32.mxu0 0.0
        %1363 = vmatmul.mubr.f32.gmra.mxu0 %v179
        %v1364 = vpop.f32.mrf.mxu0
        %v1365 = vadd.f32 0.0, %v1364
        %v1366 = vpop.f32.mrf.mxu0
        %v1367 = vadd.f32 0.0, %v1366
        %1368 = vmatprep.mubr.f32.mxu0 0.0
        %1369 = vmatmul.mubr.f32.gmra.mxu0 %v180
        %v1370 = vpop.f32.mrf.mxu0
        %v1371 = vadd.f32 0.0, %v1370
        %v1372 = vpop.f32.mrf.mxu0
        %v1373 = vadd.f32 0.0, %v1372
        %1374 = vmatprep.mubr.f32.mxu0 0.0
        %1375 = vmatmul.mubr.f32.gmra.mxu0 %v181
        %v1376 = vpop.f32.mrf.mxu0
        %v1377 = vadd.f32 0.0, %v1376
        %v1378 = vpop.f32.mrf.mxu0
        %v1379 = vadd.f32 0.0, %v1378
        %1380 = vmatprep.mubr.f32.mxu0 0.0
        %1381 = vmatmul.mubr.f32.gmra.mxu0 %v182
        %v1382 = vpop.f32.mrf.mxu0
        %v1383 = vadd.f32 0.0, %v1382
        %v1384 = vpop.f32.mrf.mxu0
        %v1385 = vadd.f32 0.0, %v1384
        %1386 = vmatprep.mubr.f32.mxu0 0.0
        %1387 = vmatmul.mubr.f32.gmra.mxu0 %v183
        %v1388 = vpop.f32.mrf.mxu0
        %v1389 = vadd.f32 0.0, %v1388
        %v1390 = vpop.f32.mrf.mxu0
        %v1391 = vadd.f32 0.0, %v1390
        %1392 = vmatprep.mubr.f32.mxu0 0.0
        %1393 = vmatmul.mubr.f32.gmra.mxu0 %v184
        %v1394 = vpop.f32.mrf.mxu0
        %v1395 = vadd.f32 0.0, %v1394
        %v1396 = vpop.f32.mrf.mxu0
        %v1397 = vadd.f32 0.0, %v1396
        %1398 = vmatprep.mubr.f32.mxu0 0.0
        %1399 = vmatmul.mubr.f32.gmra.mxu0 %v185
        %v1400 = vpop.f32.mrf.mxu0
        %v1401 = vadd.f32 0.0, %v1400
        %v1402 = vpop.f32.mrf.mxu0
        %v1403 = vadd.f32 0.0, %v1402
        %1404 = vmatprep.mubr.f32.mxu0 0.0
        %1405 = vmatmul.mubr.f32.gmra.mxu0 %v186
        %v1406 = vpop.f32.mrf.mxu0
        %v1407 = vadd.f32 0.0, %v1406
        %v1408 = vpop.f32.mrf.mxu0
        %v1409 = vadd.f32 0.0, %v1408
        %1410 = vdwg.mxu0
        %v1411 = vmax.f32 %v1089, %v1252
        %v1412 = vmax.f32 %v1090, %v1254
        %v1413 = vmax.f32 %v1091, %v1365
        %v1414 = vmax.f32 %v1092, %v1367
        %v1415 = vmax.f32 %v1093, %v1258
        %v1416 = vmax.f32 %v1094, %v1260
        %v1417 = vmax.f32 %v1095, %v1371
        %v1418 = vmax.f32 %v1096, %v1373
        %v1419 = vmax.f32 %v1097, %v1264
        %v1420 = vmax.f32 %v1098, %v1266
        %v1421 = vmax.f32 %v1099, %v1377
        %v1422 = vmax.f32 %v1100, %v1379
        %v1423 = vmax.f32 %v1101, %v1270
        %v1424 = vmax.f32 %v1102, %v1272
        %v1425 = vmax.f32 %v1103, %v1383
        %v1426 = vmax.f32 %v1104, %v1385
        %v1427 = vmax.f32 %v1105, %v1276
        %v1428 = vmax.f32 %v1106, %v1278
        %v1429 = vmax.f32 %v1107, %v1389
        %v1430 = vmax.f32 %v1108, %v1391
        %v1431 = vmax.f32 %v1109, %v1282
        %v1432 = vmax.f32 %v1110, %v1284
        %v1433 = vmax.f32 %v1111, %v1395
        %v1434 = vmax.f32 %v1112, %v1397
        %v1435 = vmax.f32 %v1113, %v1288
        %v1436 = vmax.f32 %v1114, %v1290
        %v1437 = vmax.f32 %v1115, %v1401
        %v1438 = vmax.f32 %v1116, %v1403
        %v1439 = vmax.f32 %v1117, %v1294
        %v1440 = vmax.f32 %v1118, %v1296
        %v1441 = vmax.f32 %v1119, %v1407
        %v1442 = vmax.f32 %v1120, %v1409
        %1443 = vst [vmem:[%s176] sm:$0xff] %v1411
        %1444 = vst [vmem:[%s176 + $0x8] sm:$0xff] %v1412
        %1445 = vst [vmem:[%s176 + $0x10] sm:$0xff] %v1413
        %1446 = vst [vmem:[%s176 + $0x18] sm:$0xff] %v1414
        %1447 = vst [vmem:[%s176 + $0x20] sm:$0xff] %v1415
        %1448 = vst [vmem:[%s176 + $0x28] sm:$0xff] %v1416
        %1449 = vst [vmem:[%s176 + $0x30] sm:$0xff] %v1417
        %1450 = vst [vmem:[%s176 + $0x38] sm:$0xff] %v1418
        %1451 = vst [vmem:[%s176 + $0x40] sm:$0xff] %v1419
        %1452 = vst [vmem:[%s176 + $0x48] sm:$0xff] %v1420
        %1453 = vst [vmem:[%s176 + $0x50] sm:$0xff] %v1421
        %1454 = vst [vmem:[%s176 + $0x58] sm:$0xff] %v1422
        %1455 = vst [vmem:[%s176 + $0x60] sm:$0xff] %v1423
        %1456 = vst [vmem:[%s176 + $0x68] sm:$0xff] %v1424
        %1457 = vst [vmem:[%s176 + $0x70] sm:$0xff] %v1425
        %1458 = vst [vmem:[%s176 + $0x78] sm:$0xff] %v1426
        %1459 = vst [vmem:[%s176 + $0x80] sm:$0xff] %v1427
        %1460 = vst [vmem:[%s176 + $0x88] sm:$0xff] %v1428
        %1461 = vst [vmem:[%s176 + $0x90] sm:$0xff] %v1429
        %1462 = vst [vmem:[%s176 + $0x98] sm:$0xff] %v1430
        %1463 = vst [vmem:[%s176 + $0xa0] sm:$0xff] %v1431
        %1464 = vst [vmem:[%s176 + $0xa8] sm:$0xff] %v1432
        %1465 = vst [vmem:[%s176 + $0xb0] sm:$0xff] %v1433
        %1466 = vst [vmem:[%s176 + $0xb8] sm:$0xff] %v1434
        %1467 = vst [vmem:[%s176 + $0xc0] sm:$0xff] %v1435
        %1468 = vst [vmem:[%s176 + $0xc8] sm:$0xff] %v1436
        %1469 = vst [vmem:[%s176 + $0xd0] sm:$0xff] %v1437
        %1470 = vst [vmem:[%s176 + $0xd8] sm:$0xff] %v1438
        %1471 = vst [vmem:[%s176 + $0xe0] sm:$0xff] %v1439
        %1472 = vst [vmem:[%s176 + $0xe8] sm:$0xff] %v1440
        %1473 = vst [vmem:[%s176 + $0xf0] sm:$0xff] %v1441
        %1474 = vst [vmem:[%s176 + $0xf8] sm:$0xff] %v1442
        %s1475 = sand.u32 %s75, 1
        %s1476 = scalar_lea.sflag [#allocation4], %s1475
        %s1477 = sand.u32 %s75, 1
        %s1478 = smul.addr %s1477, 256
        %s1479 = scalar_lea.vmem [#allocation7], %s1478
        // Predicated region
        $region37: #{tpu_custom_call.1} parent=27 // pred_check
          %p1480 = pneg %p85
        $region38: #{tpu_custom_call.1} parent=27 // pred_check_branch
          %1482 = sbr.rel (%p1480) target = $region40
        $region39: #{tpu_custom_call.1} parent=27 // pred_region
          %s1483 = smul.u32 8, %s20
          %s1485 = ssub.s32 4096, 4096
          %1486 = vsyncadd %s1476, %s1485
          %s1487 = smul.addr %s1483, 4
          %s1488 = smul.addr %s1487, 128
          %s1489 = scalar_lea.hbm %s2, %s1488
          %s1490 = sshll.u32 %s1479, 4
          %s1491 = int_to_ptr.vmem [resolvable:$true] %s1490
          %1496 = dma.vmem_to_hbm [thread:$0]  %s1491, 4096, %s1489, %s1476, 512, 512, 32
        $region40: #{tpu_custom_call.1} parent=27 // pred_fallthru
          _
      $region28: #{tpu_custom_call.1} parent=5 // pred_fallthru
        _
      %p1497 = scmp.le.s32.totalorder 2, %s15
      // Predicated region
      $region41: #{tpu_custom_call.1} parent=5 // pred_check
        %p1498 = pneg %p1497
      $region42: #{tpu_custom_call.1} parent=5 // pred_check_branch
        %1500 = sbr.rel (%p1498) target = $region44
      $region43: #{tpu_custom_call.1} parent=5 // pred_region
        %s1501 = ssub.s32 %s15, 2
        // Predicated region
        $region45: #{tpu_custom_call.1} parent=43 // pred_check
          %p1502 = pneg %p91
        $region46: #{tpu_custom_call.1} parent=43 // pred_check_branch
          %1504 = sbr.rel (%p1502) target = $region48
        $region47: #{tpu_custom_call.1} parent=43 // pred_region
          %s1505 = sand.u32 %s76, 1
          %s1506 = scalar_lea.sflag [#allocation4], %s1505
          %s1507 = sand.u32 %s76, 1
          %s1508 = smul.addr %s1507, 256
          %s1509 = scalar_lea.vmem [#allocation7], %s1508
          %1510 = dma.done %s1506, 4096
        $region48: #{tpu_custom_call.1} parent=43 // pred_fallthru
          _
      $region44: #{tpu_custom_call.1} parent=5 // pred_fallthru
        _
    $region6: #{tpu_custom_call.1} parent=1 // loop_footer
      %s19 = sadd.s32 1, %s15
    $region7: #{tpu_custom_call.1} parent=1 // loop_footer_branch
      %14 = sbr.rel target = $region3
    $region8: #{tpu_custom_call.1} parent=1 // loop_exit
      _
    %1511 = vsyncpa [#allocation3], 1
    %s1512 = scalar_lea.sflag [#allocation3], 1
    %1513 = vsyncpa %s1512, 1
    %1514 = vsyncpa [#allocation6], 1
    %1515 = vsyncpa [#allocation4], 1
    %s1516 = scalar_lea.sflag [#allocation4], 1
    %1517 = vsyncpa %s1516, 1

</llo_original>
